<compile_context>
chip_gen: v7x
topology: tpu7x:2x2x1
jax: 0.10.0
libtpu: 0.0.40
codegen_flags: <defaults>
</compile_context>

<pallas_src>
import jax
import jax.numpy as jnp
from jax.experimental import pallas as pl
from jax.experimental.pallas import tpu as pltpu

NEG_BIG = -1e30          # matches the -1e+30 masked_fill in att_flow_layer
N_ALT = 3
OUT_LANES = 128          # lane-dense output padding


def _softmax(x, axis):
    """Masked-input-safe softmax; approx reciprocal on the EUP."""
    m = jnp.max(x, axis=axis, keepdims=True)
    e = jnp.exp(x - m)
    return e * pl.reciprocal(jnp.sum(e, axis=axis, keepdims=True), approx=True)


# --------------------------------------------------------------------------
# Fused kernel: one grid step handles one batch block.
# --------------------------------------------------------------------------
def bidaf_kernel(c_ref, q_ref, cm_ref, qmr_ref, qmc_ref, alt_ref, am_ref,
                 ws_ref, wv_ref, wbig_ref, wmpp_ref, wqp2_ref, out_ref):
    c = c_ref[...]                        # (bb, c_len, 2H)   bf16
    q = q_ref[...]                        # (bb, q_len, 2H)   bf16
    cm = cm_ref[...]                      # (bb, c_len, 1)    f32
    qmr = qmr_ref[...]                    # (bb, 1, q_len)    f32
    qmc = qmc_ref[...]                    # (bb, q_len, 1)    f32
    alt = alt_ref[...]                    # (bb, 3, a_len, H) bf16
    am = am_ref[...]                      # (bb, 3, a_len, 1) f32

    bb, c_len, d2 = c.shape
    q_len = q.shape[1]
    h = wv_ref.shape[1]

    # packed row-vector weights (kept f32; tiny)
    w_c = ws_ref[0:1, :]                  # att_c
    w_q = ws_ref[1:2, :]                  # att_q
    w_cq = ws_ref[2:3, :]                 # att_cq
    w_a = wv_ref[0:1, :]                  # a_att
    v_q = wv_ref[1:2, :]                  # vq
    v_p = wv_ref[2:3, :]                  # vp

    c32 = c.astype(jnp.float32)
    q32 = q.astype(jnp.float32)

    # -------------------- attention flow layer --------------------
    # s[b,i,j] = c_i.w_c + q_j.w_q + (c_i*q_j).w_cq  (+ bias, which cancels:
    # s is only consumed through shift-invariant softmaxes).
    s_c = jnp.sum(c32 * w_c, axis=2, keepdims=True)              # VPU row-reduce
    ck = (c32 * w_cq + w_q).astype(jnp.bfloat16)                 # folds the w_q term
    s = s_c + jnp.einsum('bcd,bqd->bcq', ck, q,
                         preferred_element_type=jnp.float32)     # (bb, c_len, q_len)
    s = jnp.where(cm == 0.0, NEG_BIG, s)
    s = jnp.where(qmr == 0.0, NEG_BIG, s)
    a_w = _softmax(s, axis=2)

    # c2q: K=q_len is tiny -> unrolled VPU MAC (overlaps with MXU work);
    # fall back to the MXU einsum for long queries.
    if q_len <= 64:
        c2q = a_w[:, :, 0:1] * q32[:, 0:1, :]
        for j in range(1, q_len):
            c2q = c2q + a_w[:, :, j:j + 1] * q32[:, j:j + 1, :]
    else:
        c2q = jnp.einsum('bcq,bqd->bcd', a_w, q,
                         preferred_element_type=jnp.float32)
    b_w = _softmax(jnp.max(s, axis=2, keepdims=True), axis=1)    # (bb, c_len, 1)
    q2c = jnp.sum(b_w * c32, axis=1, keepdims=True)              # (bb, 1, 2H)

    # g = c_mask * [c, c2q, c*c2q, c*q2c] built lane-dense (4*2H lanes)
    gcat = jnp.concatenate(
        [cm * c32, cm * c2q, cm * (c32 * c2q), cm * (c32 * q2c)], axis=2)
    m_rows = bb * c_len
    gflat = gcat.reshape(m_rows, 4 * d2).astype(jnp.bfloat16)    # (bb*c_len, 8H)

    # -------------------- modeling + pointer/predict (g part) ----------
    # One K=8H matmul against [Wm | Wp1_g | Wpred_g]  -> N = 2H + 2H.
    big = jnp.dot(gflat, wbig_ref[...], preferred_element_type=jnp.float32)
    # TODO(synk): modeling_rnn is an external bidirectional encoder.Rnn; a
    # deterministic tanh-linear projection (8H -> 2H) stands in.
    mf = jnp.tanh(big[:, :d2])                                   # modeling layer
    # m part of wp1/wpred, fused into one (2H -> 2H) matmul.
    pp = big[:, d2:] + jnp.dot(mf.astype(jnp.bfloat16), wmpp_ref[...],
                               preferred_element_type=jnp.float32)
    hp_f = pp[:, :h].reshape(bb, c_len, h)                       # wp1([g, m])
    p_f = pp[:, h:].reshape(bb, c_len, h)                        # predict-per-row([g, m])

    # -------------------- query pointer: rq (Wq/Wp2 fused) -------------
    qf = q32.reshape(bb * q_len, d2).astype(jnp.bfloat16)
    qres = jnp.dot(qf, wqp2_ref[...], preferred_element_type=jnp.float32)
    hq = jnp.tanh(qres[:, :h]).reshape(bb, q_len, h)
    qw = qres[:, h:].reshape(bb, q_len, h)                       # q_j @ Wp2
    sj = jnp.sum(hq * v_q, axis=2, keepdims=True)                # vq(tanh(wq(q)))
    sj = jnp.where(qmc == 0.0, NEG_BIG, sj)
    sj = _softmax(sj, axis=1)
    rq_h = jnp.sum(sj * qw, axis=1, keepdims=True)               # wp2(rq), (bb,1,H)

    # -------------------- passage pointer + predict ---------------------
    hp = jnp.tanh(hp_f + rq_h)
    sp = jnp.sum(hp * v_p, axis=2, keepdims=True)
    sp = jnp.where(cm == 0.0, NEG_BIG, sp)
    sp = _softmax(sp, axis=1)
    # predict(sum_c sp_c * gm_c) == sum_c sp_c * (gm_c @ Wpred)  (both linear)
    rp = jnp.sum(sp * p_f, axis=1, keepdims=True)                # (bb, 1, H)
    rp = jnp.where(rp >= 0.0, rp, 0.01 * rp)                     # leaky_relu; dropout=id

    # -------------------- alternative pooling (all 3 at once) -----------
    alt32 = alt.astype(jnp.float32)
    alpha = jnp.sum(alt32 * w_a, axis=3, keepdims=True)          # a_att(alt)
    alpha = jnp.where(am == 0.0, NEG_BIG, alpha)
    alpha = _softmax(alpha, axis=2)
    pooled = jnp.sum(alpha * alt32, axis=2)                      # (bb, 3, H)
    score = jnp.sum(pooled * rp, axis=2)                         # (bb, 3)

    # final softmax over 128 lanes; padding lanes contribute exactly 0
    lane = jax.lax.broadcasted_iota(jnp.int32, (bb, OUT_LANES), 1)
    logits = jnp.full((bb, OUT_LANES), NEG_BIG, dtype=jnp.float32)
    for k in range(N_ALT):
        logits = jnp.where(lane == k, score[:, k:k + 1], logits)
    mx = jnp.max(logits, axis=1, keepdims=True)
    e = jnp.exp(logits - mx)
    out_ref[...] = (e / jnp.sum(e, axis=1, keepdims=True))[None]  # exact divide


# --------------------------------------------------------------------------
# VMEM budgeting / block-size selection
# --------------------------------------------------------------------------
def _block_vmem_bytes(bb, c_len, q_len, a_len, d2, h):
    f32, bf16 = 4, 2
    d8 = 4 * d2
    n_out = d2 + 2 * h
    io = 2 * (bb * c_len * d2 * bf16 + bb * q_len * d2 * bf16
              + bb * N_ALT * a_len * h * bf16
              + bb * c_len * f32 + 2 * bb * q_len * f32
              + bb * N_ALT * a_len * f32
              + bb * OUT_LANES * f32)                         # double-buffered I/O
    w = 2 * ((3 * d2 + 3 * h) * f32
             + (d8 * n_out + d2 * 2 * h + d2 * 2 * h) * bf16)  # weights (2 bufs)
    inter = (2 * bb * c_len * q_len * f32                      # s, a_w
             + 4 * bb * c_len * d2 * f32                       # c2q + g slabs
             + bb * c_len * d8 * (f32 + bf16)                  # gcat f32 + bf16 copy
             + bb * c_len * (n_out + 2 * h) * f32              # big + pp
             + bb * q_len * 2 * h * f32)
    return io + w + inter


def _choose_bb(B, c_len, q_len, a_len, d2, h, budget_bytes):
    divisors = [d for d in range(1, B + 1) if B % d == 0]
    feasible = [d for d in divisors
                if _block_vmem_bytes(d, c_len, q_len, a_len, d2, h) <= budget_bytes]
    if not feasible:
        feasible = [1]
    # prefer grid >= 2 and even (v7x has 2 TensorCores), then the largest block
    for d in sorted(feasible, reverse=True):
        g = B // d
        if g >= 2 and g % 2 == 0:
            return d
    for d in sorted(feasible, reverse=True):
        if B // d >= 2:
            return d
    return max(feasible)


# --------------------------------------------------------------------------
# Host wrapper
# --------------------------------------------------------------------------
def bidaf_forward(c, q, c_mask, q_mask, alt, alt_mask,
                  w_c, w_q, w_cq, w_a, Wm, Wq, vq, Wp1, Wp2, vp, Wpred,
                  *, batch_block=None):
    """c/q: (B, len, 2H) encoded; alt: (B, 3, a_len, H) encoded; masks 0/1."""
    B, c_len, D2 = c.shape
    q_len = q.shape[1]
    H = Wq.shape[1]
    a_len = alt.shape[2]
    D8 = 4 * D2
    assert c_len % 8 == 0 and q_len % 8 == 0 and a_len % 8 == 0
    assert Wm.shape == (D8, D2) and Wp1.shape == (D8 + D2, H)
    assert Wpred.shape == (D8 + D2, H) and Wp2.shape == (D2, H)

    # ---- weight packing (fused MXU slabs, bf16 operands, f32 accumulation) ----
    ws = jnp.concatenate([w_c, w_q, w_cq], axis=0).astype(jnp.float32)   # (3, 2H)
    wv = jnp.concatenate([w_a, vq, vp], axis=0).astype(jnp.float32)      # (3, H)
    w_big = jnp.concatenate([Wm, Wp1[:D8], Wpred[:D8]],
                            axis=1).astype(jnp.bfloat16)                 # (8H, 2H+2H)
    w_mpp = jnp.concatenate([Wp1[D8:], Wpred[D8:]],
                            axis=1).astype(jnp.bfloat16)                 # (2H, 2H)
    w_qp2 = jnp.concatenate([Wq, Wp2], axis=1).astype(jnp.bfloat16)      # (2H, 2H)

    # ---- activation packing ----
    c_b = c.astype(jnp.bfloat16)
    q_b = q.astype(jnp.bfloat16)
    alt_b = alt.astype(jnp.bfloat16)
    cm = c_mask[:, :, None].astype(jnp.float32)                 # (B, c_len, 1)
    qmr = q_mask[:, None, :].astype(jnp.float32)                # (B, 1, q_len)
    qmc = q_mask[:, :, None].astype(jnp.float32)                # (B, q_len, 1)
    am = alt_mask[:, :, :, None].astype(jnp.float32)            # (B, 3, a_len, 1)

    # ---- block size / VMEM budget (v7x-safe: 64 MiB physical VMEM) ----
    if batch_block is None:
        bb = _choose_bb(B, c_len, q_len, a_len, D2, H, budget_bytes=20 << 20)
    else:
        bb = batch_block
    assert B % bb == 0
    grid = B // bb
    est = _block_vmem_bytes(bb, c_len, q_len, a_len, D2, H)
    vmem_limit = int(min(max(2 * est + (4 << 20), 32 << 20), 48 << 20))

    out = pl.pallas_call(
        bidaf_kernel,
        out_shape=jax.ShapeDtypeStruct((grid, bb, OUT_LANES), jnp.float32),
        grid=(grid,),
        in_specs=[
            pl.BlockSpec((bb, c_len, D2), lambda i: (i, 0, 0)),
            pl.BlockSpec((bb, q_len, D2), lambda i: (i, 0, 0)),
            pl.BlockSpec((bb, c_len, 1), lambda i: (i, 0, 0)),
            pl.BlockSpec((bb, 1, q_len), lambda i: (i, 0, 0)),
            pl.BlockSpec((bb, q_len, 1), lambda i: (i, 0, 0)),
            pl.BlockSpec((bb, N_ALT, a_len, H), lambda i: (i, 0, 0, 0)),
            pl.BlockSpec((bb, N_ALT, a_len, 1), lambda i: (i, 0, 0, 0)),
            pl.BlockSpec((3, D2), lambda i: (0, 0)),            # [w_c; w_q; w_cq]
            pl.BlockSpec((3, H), lambda i: (0, 0)),             # [w_a; vq; vp]
            pl.BlockSpec((D8, D2 + 2 * H), lambda i: (0, 0)),   # [Wm | Wp1_g | Wpred_g]
            pl.BlockSpec((D2, 2 * H), lambda i: (0, 0)),        # [Wp1_m | Wpred_m]
            pl.BlockSpec((D2, 2 * H), lambda i: (0, 0)),        # [Wq | Wp2]
        ],
        out_specs=pl.BlockSpec((1, bb, OUT_LANES), lambda i: (i, 0, 0)),
        compiler_params=pltpu.CompilerParams(
            dimension_semantics=("parallel",),
            vmem_limit_bytes=vmem_limit),
    )(c_b, q_b, cm, qmr, qmc, alt_b, am, ws, wv, w_big, w_mpp, w_qp2)
    return out.reshape(B, OUT_LANES)[:, :N_ALT]                 # (B, 3)


# --------------------------------------------------------------------------
# Parameter init (xavier_uniform gain 0.1, like reset_param) + example inputs
# --------------------------------------------------------------------------
def xavier(key, shape, fan_in, fan_out, gain=0.1):
    bound = gain * (6.0 / (fan_in + fan_out)) ** 0.5
    return jax.random.uniform(key, shape, jnp.float32, -bound, bound)


def linear_bias(key, fan_in):
    b = 1.0 / (fan_in ** 0.5)
    return jax.random.uniform(key, (), jnp.float32, -b, b)


def length_mask(lens, max_len):
    return (jnp.arange(max_len)[None, :] < jnp.asarray(lens)[:, None]).astype(jnp.float32)


if __name__ == "__main__":
    H = 32
    D2, D8, D10 = 2 * H, 8 * H, 10 * H
    B, C_LEN, Q_LEN, A_LEN = 2, 16, 8, 8

    key = jax.random.PRNGKey(0)
    ks = list(jax.random.split(key, 24))

    # TODO(synk): embedding.ExtendEmbedding + encoder_{p,q,a} are external RNN
    # encoders; their encoded outputs are modeled as deterministic inputs.
    passage_vec = jax.random.normal(ks[0], (B, C_LEN, D2), jnp.float32)   # encoder_p out
    query_vec = jax.random.normal(ks[1], (B, Q_LEN, D2), jnp.float32)     # encoder_q out
    alt_enc = jax.random.normal(ks[2], (3, B, A_LEN, H), jnp.float32)     # encoder_a outs

    passage_mask = length_mask([C_LEN, 12], C_LEN)                        # (B, c_len)
    query_mask = length_mask([Q_LEN, 6], Q_LEN)                           # (B, q_len)
    alt_mask = length_mask([A_LEN, 5, 7, A_LEN, 6, 4], A_LEN).reshape(3, B, A_LEN)

    # ---- parameters (shapes from the module's __init__) ----
    w_a = xavier(ks[3], (1, H), H, 1)                 # a_att
    w_c = xavier(ks[4], (1, D2), D2, 1)               # att_c
    b_c = linear_bias(ks[5], D2)
    w_q = xavier(ks[6], (1, D2), D2, 1)               # att_q
    b_q = linear_bias(ks[7], D2)
    w_cq = xavier(ks[8], (1, D2), D2, 1)              # att_cq
    b_cq = linear_bias(ks[9], D2)
    # b_c + b_q + b_cq add a constant to every entry of s; s is only consumed
    # through shift-invariant softmaxes, so the bias cancels and is folded away.
    _ = (b_c, b_q, b_cq)

    Wm = xavier(ks[10], (D8, D2), D8, D2)             # modeling stand-in (8H -> 2H)
    Wq = xavier(ks[11], (D2, H), D2, H)               # wq
    vq = xavier(ks[12], (1, H), H, 1)                 # vq
    Wp1 = xavier(ks[13], (D10, H), D10, H)            # wp1
    Wp2 = xavier(ks[14], (D2, H), D2, H)              # wp2
    vp = xavier(ks[15], (1, H), H, 1)                 # vp
    Wpred = xavier(ks[16], (D10, H), D10, H)          # predict

    alt_vec = jnp.transpose(alt_enc, (1, 0, 2, 3))    # (B, 3, a_len, H)
    alt_mask_b = jnp.transpose(alt_mask, (1, 0, 2))   # (B, 3, a_len)

    out = bidaf_forward(passage_vec, query_vec, passage_mask, query_mask,
                        alt_vec, alt_mask_b,
                        w_c, w_q, w_cq, w_a, Wm, Wq, vq, Wp1, Wp2, vp, Wpred)

    jax.block_until_ready(out)
    assert out.shape == (B, 3)
    assert bool(jnp.all(jnp.isfinite(out)))
    assert bool(jnp.allclose(out.sum(axis=-1), 1.0, atol=1e-5))
    print("KERNEL_OK")
</pallas_src>

<mosaic_0001>
module attributes {stable_mosaic.version = 11 : i64} {
  func.func @bidaf_kernel(%arg0: i32, %arg1: memref<1x16x64xbf16, #tpu.memory_space<vmem>>, %arg2: memref<1x8x64xbf16, #tpu.memory_space<vmem>>, %arg3: memref<1x16x1xf32, #tpu.memory_space<vmem>>, %arg4: memref<1x1x8xf32, #tpu.memory_space<vmem>>, %arg5: memref<1x8x1xf32, #tpu.memory_space<vmem>>, %arg6: memref<1x3x8x32xbf16, #tpu.memory_space<vmem>>, %arg7: memref<1x3x8x1xf32, #tpu.memory_space<vmem>>, %arg8: memref<3x64xf32, #tpu.memory_space<vmem>>, %arg9: memref<3x32xf32, #tpu.memory_space<vmem>>, %arg10: memref<256x128xbf16, #tpu.memory_space<vmem>>, %arg11: memref<64x64xbf16, #tpu.memory_space<vmem>>, %arg12: memref<64x64xbf16, #tpu.memory_space<vmem>>, %arg13: memref<1x1x128xf32, #tpu.memory_space<vmem>>) attributes {dimension_semantics = [#tpu.dimension_semantics<parallel>], iteration_bounds = array<i64: 2>, scalar_prefetch = 0 : i64, scratch_operands = 0 : i64, tpu.core_type = #tpu.core_type<tc>, window_params = [{transform_indices = @transform_0, window_bounds = array<i64: 1, 16, 64>}, {transform_indices = @transform_1, window_bounds = array<i64: 1, 8, 64>}, {transform_indices = @transform_2, window_bounds = array<i64: 1, 16, 1>}, {transform_indices = @transform_3, window_bounds = array<i64: 1, 1, 8>}, {transform_indices = @transform_4, window_bounds = array<i64: 1, 8, 1>}, {transform_indices = @transform_5, window_bounds = array<i64: 1, 3, 8, 32>}, {transform_indices = @transform_6, window_bounds = array<i64: 1, 3, 8, 1>}, {pipeline_mode = #tpu.pipeline_mode<synchronous>, transform_indices = @transform_7, window_bounds = array<i64: 3, 64>}, {pipeline_mode = #tpu.pipeline_mode<synchronous>, transform_indices = @transform_8, window_bounds = array<i64: 3, 32>}, {pipeline_mode = #tpu.pipeline_mode<synchronous>, transform_indices = @transform_9, window_bounds = array<i64: 256, 128>}, {pipeline_mode = #tpu.pipeline_mode<synchronous>, transform_indices = @transform_10, window_bounds = array<i64: 64, 64>}, {pipeline_mode = #tpu.pipeline_mode<synchronous>, transform_indices = @transform_11, window_bounds = array<i64: 64, 64>}, {transform_indices = @transform_12, window_bounds = array<i64: 1, 1, 128>}]} {
    %c0 = arith.constant 0 : index
    %c0_0 = arith.constant 0 : index
    %c0_1 = arith.constant 0 : index
    %0 = vector.load %arg1[%c0, %c0_0, %c0_1] : memref<1x16x64xbf16, #tpu.memory_space<vmem>>, vector<1x16x64xbf16>
    %c0_2 = arith.constant 0 : index
    %c0_3 = arith.constant 0 : index
    %c0_4 = arith.constant 0 : index
    %1 = vector.load %arg2[%c0_2, %c0_3, %c0_4] : memref<1x8x64xbf16, #tpu.memory_space<vmem>>, vector<1x8x64xbf16>
    %c0_5 = arith.constant 0 : index
    %c0_6 = arith.constant 0 : index
    %c0_7 = arith.constant 0 : index
    %2 = vector.load %arg3[%c0_5, %c0_6, %c0_7] : memref<1x16x1xf32, #tpu.memory_space<vmem>>, vector<1x16x1xf32>
    %c0_8 = arith.constant 0 : index
    %c0_9 = arith.constant 0 : index
    %c0_10 = arith.constant 0 : index
    %3 = vector.load %arg4[%c0_8, %c0_9, %c0_10] : memref<1x1x8xf32, #tpu.memory_space<vmem>>, vector<1x1x8xf32>
    %c0_11 = arith.constant 0 : index
    %c0_12 = arith.constant 0 : index
    %c0_13 = arith.constant 0 : index
    %4 = vector.load %arg5[%c0_11, %c0_12, %c0_13] : memref<1x8x1xf32, #tpu.memory_space<vmem>>, vector<1x8x1xf32>
    %c0_14 = arith.constant 0 : index
    %c0_15 = arith.constant 0 : index
    %c0_16 = arith.constant 0 : index
    %c0_17 = arith.constant 0 : index
    %5 = vector.load %arg6[%c0_14, %c0_15, %c0_16, %c0_17] : memref<1x3x8x32xbf16, #tpu.memory_space<vmem>>, vector<1x3x8x32xbf16>
    %c0_18 = arith.constant 0 : index
    %c0_19 = arith.constant 0 : index
    %c0_20 = arith.constant 0 : index
    %c0_21 = arith.constant 0 : index
    %6 = vector.load %arg7[%c0_18, %c0_19, %c0_20, %c0_21] : memref<1x3x8x1xf32, #tpu.memory_space<vmem>>, vector<1x3x8x1xf32>
    %c0_22 = arith.constant 0 : index
    %c0_23 = arith.constant 0 : index
    %7 = vector.load %arg8[%c0_22, %c0_23] : memref<3x64xf32, #tpu.memory_space<vmem>>, vector<1x64xf32>
    %c1 = arith.constant 1 : index
    %c0_24 = arith.constant 0 : index
    %8 = vector.load %arg8[%c1, %c0_24] : memref<3x64xf32, #tpu.memory_space<vmem>>, vector<1x64xf32>
    %c2 = arith.constant 2 : index
    %c0_25 = arith.constant 0 : index
    %9 = vector.load %arg8[%c2, %c0_25] : memref<3x64xf32, #tpu.memory_space<vmem>>, vector<1x64xf32>
    %c0_26 = arith.constant 0 : index
    %c0_27 = arith.constant 0 : index
    %10 = vector.load %arg9[%c0_26, %c0_27] : memref<3x32xf32, #tpu.memory_space<vmem>>, vector<1x32xf32>
    %c1_28 = arith.constant 1 : index
    %c0_29 = arith.constant 0 : index
    %11 = vector.load %arg9[%c1_28, %c0_29] : memref<3x32xf32, #tpu.memory_space<vmem>>, vector<1x32xf32>
    %c2_30 = arith.constant 2 : index
    %c0_31 = arith.constant 0 : index
    %12 = vector.load %arg9[%c2_30, %c0_31] : memref<3x32xf32, #tpu.memory_space<vmem>>, vector<1x32xf32>
    %13 = arith.extf %0 : vector<1x16x64xbf16> to vector<1x16x64xf32>
    %14 = arith.extf %1 : vector<1x8x64xbf16> to vector<1x8x64xf32>
    %15 = vector.shape_cast %7 : vector<1x64xf32> to vector<1x1x64xf32>
    %16 = vector.broadcast %15 : vector<1x1x64xf32> to vector<1x16x64xf32>
    %17 = arith.mulf %13, %16 : vector<1x16x64xf32>
    %cst = arith.constant dense<0.000000e+00> : vector<1x16xf32>
    %18 = vector.multi_reduction <add>, %17, %cst [2] : vector<1x16x64xf32> to vector<1x16xf32>
    %19 = vector.shape_cast %18 : vector<1x16xf32> to vector<1x16x1xf32>
    %20 = vector.shape_cast %9 : vector<1x64xf32> to vector<1x1x64xf32>
    %21 = vector.broadcast %20 : vector<1x1x64xf32> to vector<1x16x64xf32>
    %22 = arith.mulf %13, %21 : vector<1x16x64xf32>
    %23 = vector.shape_cast %8 : vector<1x64xf32> to vector<1x1x64xf32>
    %24 = vector.broadcast %23 : vector<1x1x64xf32> to vector<1x16x64xf32>
    %25 = arith.addf %22, %24 : vector<1x16x64xf32>
    %26 = arith.truncf %25 : vector<1x16x64xf32> to vector<1x16x64xbf16>
    "tpu.trace_start"() <{level = 10 : i32, message = "bcd,bqd->bcq"}> : () -> ()
    %cst_32 = arith.constant dense<0.000000e+00> : vector<1x16x8xf32>
    %27 = tpu.matmul %26, %1, %cst_32 {dimension_numbers = #tpu.dot_dimension_numbers<[2], [2], [1], [1], [0, 0, 0, 1, 1, 1], [0], [0]>} : vector<1x16x64xbf16>, vector<1x8x64xbf16>, vector<1x16x8xf32> -> vector<1x16x8xf32>
    "tpu.trace_stop"() : () -> ()
    %28 = vector.broadcast %19 : vector<1x16x1xf32> to vector<1x16x8xf32>
    %29 = arith.addf %28, %27 : vector<1x16x8xf32>
    %cst_33 = arith.constant 0.000000e+00 : f32
    %30 = vector.broadcast %cst_33 : f32 to vector<1x16x1xf32>
    %31 = arith.cmpf oeq, %2, %30 : vector<1x16x1xf32>
    %cst_34 = arith.constant -1.000000e+30 : f32
    %32 = vector.shape_cast %31 : vector<1x16x1xi1> to vector<1x16x1xi1>
    %33 = vector.broadcast %32 : vector<1x16x1xi1> to vector<1x16x8xi1>
    %34 = vector.broadcast %cst_34 : f32 to vector<1x16x8xf32>
    %35 = arith.select %33, %34, %29 : vector<1x16x8xi1>, vector<1x16x8xf32>
    %cst_35 = arith.constant 0.000000e+00 : f32
    %36 = vector.broadcast %cst_35 : f32 to vector<1x1x8xf32>
    %37 = arith.cmpf oeq, %3, %36 : vector<1x1x8xf32>
    %cst_36 = arith.constant -1.000000e+30 : f32
    %38 = vector.shape_cast %37 : vector<1x1x8xi1> to vector<1x1x8xi1>
    %39 = vector.broadcast %38 : vector<1x1x8xi1> to vector<1x16x8xi1>
    %40 = vector.broadcast %cst_36 : f32 to vector<1x16x8xf32>
    %41 = arith.select %39, %40, %35 : vector<1x16x8xi1>, vector<1x16x8xf32>
    %cst_37 = arith.constant dense<0xFF800000> : vector<1x16xf32>
    %42 = vector.multi_reduction <maximumf>, %41, %cst_37 [2] : vector<1x16x8xf32> to vector<1x16xf32>
    %43 = vector.shape_cast %42 : vector<1x16xf32> to vector<1x16x1xf32>
    %44 = vector.broadcast %43 : vector<1x16x1xf32> to vector<1x16x8xf32>
    %45 = arith.subf %41, %44 : vector<1x16x8xf32>
    %46 = math.exp %45 : vector<1x16x8xf32>
    %cst_38 = arith.constant dense<0.000000e+00> : vector<1x16xf32>
    %47 = vector.multi_reduction <add>, %46, %cst_38 [2] : vector<1x16x8xf32> to vector<1x16xf32>
    %48 = vector.shape_cast %47 : vector<1x16xf32> to vector<1x16x1xf32>
    %49 = tpu.reciprocal %48 {approx = true} : vector<1x16x1xf32> -> vector<1x16x1xf32>
    %50 = vector.broadcast %49 : vector<1x16x1xf32> to vector<1x16x8xf32>
    %51 = arith.mulf %46, %50 : vector<1x16x8xf32>
    %52 = vector.extract_strided_slice %51 {offsets = [0, 0, 0], sizes = [1, 16, 1], strides = [1, 1, 1]} : vector<1x16x8xf32> to vector<1x16x1xf32>
    %53 = vector.extract_strided_slice %14 {offsets = [0, 0, 0], sizes = [1, 1, 64], strides = [1, 1, 1]} : vector<1x8x64xf32> to vector<1x1x64xf32>
    %54 = vector.broadcast %52 : vector<1x16x1xf32> to vector<1x16x64xf32>
    %55 = vector.broadcast %53 : vector<1x1x64xf32> to vector<1x16x64xf32>
    %56 = arith.mulf %54, %55 : vector<1x16x64xf32>
    %57 = vector.extract_strided_slice %51 {offsets = [0, 0, 1], sizes = [1, 16, 1], strides = [1, 1, 1]} : vector<1x16x8xf32> to vector<1x16x1xf32>
    %58 = vector.extract_strided_slice %14 {offsets = [0, 1, 0], sizes = [1, 1, 64], strides = [1, 1, 1]} : vector<1x8x64xf32> to vector<1x1x64xf32>
    %59 = vector.broadcast %57 : vector<1x16x1xf32> to vector<1x16x64xf32>
    %60 = vector.broadcast %58 : vector<1x1x64xf32> to vector<1x16x64xf32>
    %61 = arith.mulf %59, %60 : vector<1x16x64xf32>
    %62 = arith.addf %56, %61 : vector<1x16x64xf32>
    %63 = vector.extract_strided_slice %51 {offsets = [0, 0, 2], sizes = [1, 16, 1], strides = [1, 1, 1]} : vector<1x16x8xf32> to vector<1x16x1xf32>
    %64 = vector.extract_strided_slice %14 {offsets = [0, 2, 0], sizes = [1, 1, 64], strides = [1, 1, 1]} : vector<1x8x64xf32> to vector<1x1x64xf32>
    %65 = vector.broadcast %63 : vector<1x16x1xf32> to vector<1x16x64xf32>
    %66 = vector.broadcast %64 : vector<1x1x64xf32> to vector<1x16x64xf32>
    %67 = arith.mulf %65, %66 : vector<1x16x64xf32>
    %68 = arith.addf %62, %67 : vector<1x16x64xf32>
    %69 = vector.extract_strided_slice %51 {offsets = [0, 0, 3], sizes = [1, 16, 1], strides = [1, 1, 1]} : vector<1x16x8xf32> to vector<1x16x1xf32>
    %70 = vector.extract_strided_slice %14 {offsets = [0, 3, 0], sizes = [1, 1, 64], strides = [1, 1, 1]} : vector<1x8x64xf32> to vector<1x1x64xf32>
    %71 = vector.broadcast %69 : vector<1x16x1xf32> to vector<1x16x64xf32>
    %72 = vector.broadcast %70 : vector<1x1x64xf32> to vector<1x16x64xf32>
    %73 = arith.mulf %71, %72 : vector<1x16x64xf32>
    %74 = arith.addf %68, %73 : vector<1x16x64xf32>
    %75 = vector.extract_strided_slice %51 {offsets = [0, 0, 4], sizes = [1, 16, 1], strides = [1, 1, 1]} : vector<1x16x8xf32> to vector<1x16x1xf32>
    %76 = vector.extract_strided_slice %14 {offsets = [0, 4, 0], sizes = [1, 1, 64], strides = [1, 1, 1]} : vector<1x8x64xf32> to vector<1x1x64xf32>
    %77 = vector.broadcast %75 : vector<1x16x1xf32> to vector<1x16x64xf32>
    %78 = vector.broadcast %76 : vector<1x1x64xf32> to vector<1x16x64xf32>
    %79 = arith.mulf %77, %78 : vector<1x16x64xf32>
    %80 = arith.addf %74, %79 : vector<1x16x64xf32>
    %81 = vector.extract_strided_slice %51 {offsets = [0, 0, 5], sizes = [1, 16, 1], strides = [1, 1, 1]} : vector<1x16x8xf32> to vector<1x16x1xf32>
    %82 = vector.extract_strided_slice %14 {offsets = [0, 5, 0], sizes = [1, 1, 64], strides = [1, 1, 1]} : vector<1x8x64xf32> to vector<1x1x64xf32>
    %83 = vector.broadcast %81 : vector<1x16x1xf32> to vector<1x16x64xf32>
    %84 = vector.broadcast %82 : vector<1x1x64xf32> to vector<1x16x64xf32>
    %85 = arith.mulf %83, %84 : vector<1x16x64xf32>
    %86 = arith.addf %80, %85 : vector<1x16x64xf32>
    %87 = vector.extract_strided_slice %51 {offsets = [0, 0, 6], sizes = [1, 16, 1], strides = [1, 1, 1]} : vector<1x16x8xf32> to vector<1x16x1xf32>
    %88 = vector.extract_strided_slice %14 {offsets = [0, 6, 0], sizes = [1, 1, 64], strides = [1, 1, 1]} : vector<1x8x64xf32> to vector<1x1x64xf32>
    %89 = vector.broadcast %87 : vector<1x16x1xf32> to vector<1x16x64xf32>
    %90 = vector.broadcast %88 : vector<1x1x64xf32> to vector<1x16x64xf32>
    %91 = arith.mulf %89, %90 : vector<1x16x64xf32>
    %92 = arith.addf %86, %91 : vector<1x16x64xf32>
    %93 = vector.extract_strided_slice %51 {offsets = [0, 0, 7], sizes = [1, 16, 1], strides = [1, 1, 1]} : vector<1x16x8xf32> to vector<1x16x1xf32>
    %94 = vector.extract_strided_slice %14 {offsets = [0, 7, 0], sizes = [1, 1, 64], strides = [1, 1, 1]} : vector<1x8x64xf32> to vector<1x1x64xf32>
    %95 = vector.broadcast %93 : vector<1x16x1xf32> to vector<1x16x64xf32>
    %96 = vector.broadcast %94 : vector<1x1x64xf32> to vector<1x16x64xf32>
    %97 = arith.mulf %95, %96 : vector<1x16x64xf32>
    %98 = arith.addf %92, %97 : vector<1x16x64xf32>
    %cst_39 = arith.constant dense<0xFF800000> : vector<1x16xf32>
    %99 = vector.multi_reduction <maximumf>, %41, %cst_39 [2] : vector<1x16x8xf32> to vector<1x16xf32>
    %100 = vector.shape_cast %99 : vector<1x16xf32> to vector<1x16x1xf32>
    %cst_40 = arith.constant dense<0xFF800000> : vector<1x1xf32>
    %101 = vector.multi_reduction <maximumf>, %100, %cst_40 [1] : vector<1x16x1xf32> to vector<1x1xf32>
    %102 = vector.shape_cast %101 : vector<1x1xf32> to vector<1x1x1xf32>
    %103 = vector.broadcast %102 : vector<1x1x1xf32> to vector<1x16x1xf32>
    %104 = arith.subf %100, %103 : vector<1x16x1xf32>
    %105 = math.exp %104 : vector<1x16x1xf32>
    %cst_41 = arith.constant dense<0.000000e+00> : vector<1x1xf32>
    %106 = vector.multi_reduction <add>, %105, %cst_41 [1] : vector<1x16x1xf32> to vector<1x1xf32>
    %107 = vector.shape_cast %106 : vector<1x1xf32> to vector<1x1x1xf32>
    %108 = tpu.reciprocal %107 {approx = true} : vector<1x1x1xf32> -> vector<1x1x1xf32>
    %109 = vector.broadcast %108 : vector<1x1x1xf32> to vector<1x16x1xf32>
    %110 = arith.mulf %105, %109 : vector<1x16x1xf32>
    %111 = vector.broadcast %110 : vector<1x16x1xf32> to vector<1x16x64xf32>
    %112 = arith.mulf %111, %13 : vector<1x16x64xf32>
    %cst_42 = arith.constant dense<0.000000e+00> : vector<1x64xf32>
    %113 = vector.multi_reduction <add>, %112, %cst_42 [1] : vector<1x16x64xf32> to vector<1x64xf32>
    %114 = vector.shape_cast %113 : vector<1x64xf32> to vector<1x1x64xf32>
    %115 = vector.broadcast %2 : vector<1x16x1xf32> to vector<1x16x64xf32>
    %116 = arith.mulf %115, %13 : vector<1x16x64xf32>
    %117 = vector.broadcast %2 : vector<1x16x1xf32> to vector<1x16x64xf32>
    %118 = arith.mulf %117, %98 : vector<1x16x64xf32>
    %119 = arith.mulf %13, %98 : vector<1x16x64xf32>
    %120 = vector.broadcast %2 : vector<1x16x1xf32> to vector<1x16x64xf32>
    %121 = arith.mulf %120, %119 : vector<1x16x64xf32>
    %122 = vector.broadcast %114 : vector<1x1x64xf32> to vector<1x16x64xf32>
    %123 = arith.mulf %13, %122 : vector<1x16x64xf32>
    %124 = vector.broadcast %2 : vector<1x16x1xf32> to vector<1x16x64xf32>
    %125 = arith.mulf %124, %123 : vector<1x16x64xf32>
    %126 = tpu.concatenate %116, %118, %121, %125 in 2 : vector<1x16x64xf32>, vector<1x16x64xf32>, vector<1x16x64xf32>, vector<1x16x64xf32> -> vector<1x16x256xf32>
    %127 = vector.shape_cast %126 : vector<1x16x256xf32> to vector<16x256xf32>
    %128 = arith.truncf %127 : vector<16x256xf32> to vector<16x256xbf16>
    %c0_43 = arith.constant 0 : index
    %c0_44 = arith.constant 0 : index
    %129 = vector.load %arg10[%c0_43, %c0_44] : memref<256x128xbf16, #tpu.memory_space<vmem>>, vector<256x128xbf16>
    %cst_45 = arith.constant dense<0.000000e+00> : vector<16x128xf32>
    %130 = tpu.matmul %128, %129, %cst_45 {dimension_numbers = #tpu.dot_dimension_numbers<[1], [0], [0], [1], [0, 0, 1, 1], [], []>} : vector<16x256xbf16>, vector<256x128xbf16>, vector<16x128xf32> -> vector<16x128xf32>
    %131 = vector.extract_strided_slice %130 {offsets = [0, 0], sizes = [16, 64], strides = [1, 1]} : vector<16x128xf32> to vector<16x64xf32>
    %132 = math.tanh %131 : vector<16x64xf32>
    %133 = vector.extract_strided_slice %130 {offsets = [0, 64], sizes = [16, 64], strides = [1, 1]} : vector<16x128xf32> to vector<16x64xf32>
    %134 = arith.truncf %132 : vector<16x64xf32> to vector<16x64xbf16>
    %c0_46 = arith.constant 0 : index
    %c0_47 = arith.constant 0 : index
    %135 = vector.load %arg11[%c0_46, %c0_47] : memref<64x64xbf16, #tpu.memory_space<vmem>>, vector<64x64xbf16>
    %cst_48 = arith.constant dense<0.000000e+00> : vector<16x64xf32>
    %136 = tpu.matmul %134, %135, %cst_48 {dimension_numbers = #tpu.dot_dimension_numbers<[1], [0], [0], [1], [0, 0, 1, 1], [], []>} : vector<16x64xbf16>, vector<64x64xbf16>, vector<16x64xf32> -> vector<16x64xf32>
    %137 = arith.addf %133, %136 : vector<16x64xf32>
    %138 = vector.extract_strided_slice %137 {offsets = [0, 0], sizes = [16, 32], strides = [1, 1]} : vector<16x64xf32> to vector<16x32xf32>
    %139 = vector.shape_cast %138 : vector<16x32xf32> to vector<1x16x32xf32>
    %140 = vector.extract_strided_slice %137 {offsets = [0, 32], sizes = [16, 32], strides = [1, 1]} : vector<16x64xf32> to vector<16x32xf32>
    %141 = vector.shape_cast %140 : vector<16x32xf32> to vector<1x16x32xf32>
    %142 = vector.shape_cast %14 : vector<1x8x64xf32> to vector<8x64xf32>
    %143 = arith.truncf %142 : vector<8x64xf32> to vector<8x64xbf16>
    %c0_49 = arith.constant 0 : index
    %c0_50 = arith.constant 0 : index
    %144 = vector.load %arg12[%c0_49, %c0_50] : memref<64x64xbf16, #tpu.memory_space<vmem>>, vector<64x64xbf16>
    %cst_51 = arith.constant dense<0.000000e+00> : vector<8x64xf32>
    %145 = tpu.matmul %143, %144, %cst_51 {dimension_numbers = #tpu.dot_dimension_numbers<[1], [0], [0], [1], [0, 0, 1, 1], [], []>} : vector<8x64xbf16>, vector<64x64xbf16>, vector<8x64xf32> -> vector<8x64xf32>
    %146 = vector.extract_strided_slice %145 {offsets = [0, 0], sizes = [8, 32], strides = [1, 1]} : vector<8x64xf32> to vector<8x32xf32>
    %147 = math.tanh %146 : vector<8x32xf32>
    %148 = vector.shape_cast %147 : vector<8x32xf32> to vector<1x8x32xf32>
    %149 = vector.extract_strided_slice %145 {offsets = [0, 32], sizes = [8, 32], strides = [1, 1]} : vector<8x64xf32> to vector<8x32xf32>
    %150 = vector.shape_cast %149 : vector<8x32xf32> to vector<1x8x32xf32>
    %151 = vector.shape_cast %11 : vector<1x32xf32> to vector<1x1x32xf32>
    %152 = vector.broadcast %151 : vector<1x1x32xf32> to vector<1x8x32xf32>
    %153 = arith.mulf %148, %152 : vector<1x8x32xf32>
    %cst_52 = arith.constant dense<0.000000e+00> : vector<1x8xf32>
    %154 = vector.multi_reduction <add>, %153, %cst_52 [2] : vector<1x8x32xf32> to vector<1x8xf32>
    %155 = vector.shape_cast %154 : vector<1x8xf32> to vector<1x8x1xf32>
    %cst_53 = arith.constant 0.000000e+00 : f32
    %156 = vector.broadcast %cst_53 : f32 to vector<1x8x1xf32>
    %157 = arith.cmpf oeq, %4, %156 : vector<1x8x1xf32>
    %cst_54 = arith.constant -1.000000e+30 : f32
    %158 = vector.broadcast %cst_54 : f32 to vector<1x8x1xf32>
    %159 = arith.select %157, %158, %155 : vector<1x8x1xi1>, vector<1x8x1xf32>
    %cst_55 = arith.constant dense<0xFF800000> : vector<1x1xf32>
    %160 = vector.multi_reduction <maximumf>, %159, %cst_55 [1] : vector<1x8x1xf32> to vector<1x1xf32>
    %161 = vector.shape_cast %160 : vector<1x1xf32> to vector<1x1x1xf32>
    %162 = vector.broadcast %161 : vector<1x1x1xf32> to vector<1x8x1xf32>
    %163 = arith.subf %159, %162 : vector<1x8x1xf32>
    %164 = math.exp %163 : vector<1x8x1xf32>
    %cst_56 = arith.constant dense<0.000000e+00> : vector<1x1xf32>
    %165 = vector.multi_reduction <add>, %164, %cst_56 [1] : vector<1x8x1xf32> to vector<1x1xf32>
    %166 = vector.shape_cast %165 : vector<1x1xf32> to vector<1x1x1xf32>
    %167 = tpu.reciprocal %166 {approx = true} : vector<1x1x1xf32> -> vector<1x1x1xf32>
    %168 = vector.broadcast %167 : vector<1x1x1xf32> to vector<1x8x1xf32>
    %169 = arith.mulf %164, %168 : vector<1x8x1xf32>
    %170 = vector.broadcast %169 : vector<1x8x1xf32> to vector<1x8x32xf32>
    %171 = arith.mulf %170, %150 : vector<1x8x32xf32>
    %cst_57 = arith.constant dense<0.000000e+00> : vector<1x32xf32>
    %172 = vector.multi_reduction <add>, %171, %cst_57 [1] : vector<1x8x32xf32> to vector<1x32xf32>
    %173 = vector.shape_cast %172 : vector<1x32xf32> to vector<1x1x32xf32>
    %174 = vector.broadcast %173 : vector<1x1x32xf32> to vector<1x16x32xf32>
    %175 = arith.addf %139, %174 : vector<1x16x32xf32>
    %176 = math.tanh %175 : vector<1x16x32xf32>
    %177 = vector.shape_cast %12 : vector<1x32xf32> to vector<1x1x32xf32>
    %178 = vector.broadcast %177 : vector<1x1x32xf32> to vector<1x16x32xf32>
    %179 = arith.mulf %176, %178 : vector<1x16x32xf32>
    %cst_58 = arith.constant dense<0.000000e+00> : vector<1x16xf32>
    %180 = vector.multi_reduction <add>, %179, %cst_58 [2] : vector<1x16x32xf32> to vector<1x16xf32>
    %181 = vector.shape_cast %180 : vector<1x16xf32> to vector<1x16x1xf32>
    %cst_59 = arith.constant 0.000000e+00 : f32
    %182 = vector.broadcast %cst_59 : f32 to vector<1x16x1xf32>
    %183 = arith.cmpf oeq, %2, %182 : vector<1x16x1xf32>
    %cst_60 = arith.constant -1.000000e+30 : f32
    %184 = vector.broadcast %cst_60 : f32 to vector<1x16x1xf32>
    %185 = arith.select %183, %184, %181 : vector<1x16x1xi1>, vector<1x16x1xf32>
    %cst_61 = arith.constant dense<0xFF800000> : vector<1x1xf32>
    %186 = vector.multi_reduction <maximumf>, %185, %cst_61 [1] : vector<1x16x1xf32> to vector<1x1xf32>
    %187 = vector.shape_cast %186 : vector<1x1xf32> to vector<1x1x1xf32>
    %188 = vector.broadcast %187 : vector<1x1x1xf32> to vector<1x16x1xf32>
    %189 = arith.subf %185, %188 : vector<1x16x1xf32>
    %190 = math.exp %189 : vector<1x16x1xf32>
    %cst_62 = arith.constant dense<0.000000e+00> : vector<1x1xf32>
    %191 = vector.multi_reduction <add>, %190, %cst_62 [1] : vector<1x16x1xf32> to vector<1x1xf32>
    %192 = vector.shape_cast %191 : vector<1x1xf32> to vector<1x1x1xf32>
    %193 = tpu.reciprocal %192 {approx = true} : vector<1x1x1xf32> -> vector<1x1x1xf32>
    %194 = vector.broadcast %193 : vector<1x1x1xf32> to vector<1x16x1xf32>
    %195 = arith.mulf %190, %194 : vector<1x16x1xf32>
    %196 = vector.broadcast %195 : vector<1x16x1xf32> to vector<1x16x32xf32>
    %197 = arith.mulf %196, %141 : vector<1x16x32xf32>
    %cst_63 = arith.constant dense<0.000000e+00> : vector<1x32xf32>
    %198 = vector.multi_reduction <add>, %197, %cst_63 [1] : vector<1x16x32xf32> to vector<1x32xf32>
    %199 = vector.shape_cast %198 : vector<1x32xf32> to vector<1x1x32xf32>
    %cst_64 = arith.constant 0.000000e+00 : f32
    %200 = vector.broadcast %cst_64 : f32 to vector<1x1x32xf32>
    %201 = arith.cmpf oge, %199, %200 : vector<1x1x32xf32>
    %cst_65 = arith.constant 0.00999999977 : f32
    %202 = vector.broadcast %cst_65 : f32 to vector<1x1x32xf32>
    %203 = arith.mulf %202, %199 : vector<1x1x32xf32>
    %204 = arith.select %201, %199, %203 : vector<1x1x32xi1>, vector<1x1x32xf32>
    %205 = arith.extf %5 : vector<1x3x8x32xbf16> to vector<1x3x8x32xf32>
    %206 = vector.shape_cast %10 : vector<1x32xf32> to vector<1x1x1x32xf32>
    %207 = vector.broadcast %206 : vector<1x1x1x32xf32> to vector<1x3x8x32xf32>
    %208 = arith.mulf %205, %207 : vector<1x3x8x32xf32>
    %cst_66 = arith.constant dense<0.000000e+00> : vector<1x3x8xf32>
    %209 = vector.multi_reduction <add>, %208, %cst_66 [3] : vector<1x3x8x32xf32> to vector<1x3x8xf32>
    %210 = vector.shape_cast %209 : vector<1x3x8xf32> to vector<1x3x8x1xf32>
    %cst_67 = arith.constant 0.000000e+00 : f32
    %211 = vector.broadcast %cst_67 : f32 to vector<1x3x8x1xf32>
    %212 = arith.cmpf oeq, %6, %211 : vector<1x3x8x1xf32>
    %cst_68 = arith.constant -1.000000e+30 : f32
    %213 = vector.broadcast %cst_68 : f32 to vector<1x3x8x1xf32>
    %214 = arith.select %212, %213, %210 : vector<1x3x8x1xi1>, vector<1x3x8x1xf32>
    %cst_69 = arith.constant dense<0xFF800000> : vector<1x3x1xf32>
    %215 = vector.multi_reduction <maximumf>, %214, %cst_69 [2] : vector<1x3x8x1xf32> to vector<1x3x1xf32>
    %216 = vector.shape_cast %215 : vector<1x3x1xf32> to vector<1x3x1x1xf32>
    %217 = vector.broadcast %216 : vector<1x3x1x1xf32> to vector<1x3x8x1xf32>
    %218 = arith.subf %214, %217 : vector<1x3x8x1xf32>
    %219 = math.exp %218 : vector<1x3x8x1xf32>
    %cst_70 = arith.constant dense<0.000000e+00> : vector<1x3x1xf32>
    %220 = vector.multi_reduction <add>, %219, %cst_70 [2] : vector<1x3x8x1xf32> to vector<1x3x1xf32>
    %221 = vector.shape_cast %220 : vector<1x3x1xf32> to vector<1x3x1x1xf32>
    %222 = tpu.reciprocal %221 {approx = true} : vector<1x3x1x1xf32> -> vector<1x3x1x1xf32>
    %223 = vector.broadcast %222 : vector<1x3x1x1xf32> to vector<1x3x8x1xf32>
    %224 = arith.mulf %219, %223 : vector<1x3x8x1xf32>
    %225 = vector.broadcast %224 : vector<1x3x8x1xf32> to vector<1x3x8x32xf32>
    %226 = arith.mulf %225, %205 : vector<1x3x8x32xf32>
    %cst_71 = arith.constant dense<0.000000e+00> : vector<1x3x32xf32>
    %227 = vector.multi_reduction <add>, %226, %cst_71 [2] : vector<1x3x8x32xf32> to vector<1x3x32xf32>
    %228 = vector.broadcast %204 : vector<1x1x32xf32> to vector<1x3x32xf32>
    %229 = arith.mulf %227, %228 : vector<1x3x32xf32>
    %cst_72 = arith.constant dense<0.000000e+00> : vector<1x3xf32>
    %230 = vector.multi_reduction <add>, %229, %cst_72 [2] : vector<1x3x32xf32> to vector<1x3xf32>
    %231 = tpu.iota {dimensions = array<i32: 1>} : vector<1x128xi32>
    %cst_73 = arith.constant -1.000000e+30 : f32
    %232 = vector.broadcast %cst_73 : f32 to vector<1x128xf32>
    %c0_i32 = arith.constant 0 : i32
    %233 = vector.broadcast %c0_i32 : i32 to vector<1x128xi32>
    %234 = arith.cmpi eq, %231, %233 : vector<1x128xi32>
    %235 = vector.extract_strided_slice %230 {offsets = [0, 0], sizes = [1, 1], strides = [1, 1]} : vector<1x3xf32> to vector<1x1xf32>
    %236 = vector.shape_cast %235 : vector<1x1xf32> to vector<1x1xf32>
    %237 = vector.broadcast %236 : vector<1x1xf32> to vector<1x128xf32>
    %238 = arith.select %234, %237, %232 : vector<1x128xi1>, vector<1x128xf32>
    %c1_i32 = arith.constant 1 : i32
    %239 = vector.broadcast %c1_i32 : i32 to vector<1x128xi32>
    %240 = arith.cmpi eq, %231, %239 : vector<1x128xi32>
    %241 = vector.extract_strided_slice %230 {offsets = [0, 1], sizes = [1, 1], strides = [1, 1]} : vector<1x3xf32> to vector<1x1xf32>
    %242 = vector.shape_cast %241 : vector<1x1xf32> to vector<1x1xf32>
    %243 = vector.broadcast %242 : vector<1x1xf32> to vector<1x128xf32>
    %244 = arith.select %240, %243, %238 : vector<1x128xi1>, vector<1x128xf32>
    %c2_i32 = arith.constant 2 : i32
    %245 = vector.broadcast %c2_i32 : i32 to vector<1x128xi32>
    %246 = arith.cmpi eq, %231, %245 : vector<1x128xi32>
    %247 = vector.extract_strided_slice %230 {offsets = [0, 2], sizes = [1, 1], strides = [1, 1]} : vector<1x3xf32> to vector<1x1xf32>
    %248 = vector.shape_cast %247 : vector<1x1xf32> to vector<1x1xf32>
    %249 = vector.broadcast %248 : vector<1x1xf32> to vector<1x128xf32>
    %250 = arith.select %246, %249, %244 : vector<1x128xi1>, vector<1x128xf32>
    %cst_74 = arith.constant dense<0xFF800000> : vector<1xf32>
    %251 = vector.multi_reduction <maximumf>, %250, %cst_74 [1] : vector<1x128xf32> to vector<1xf32>
    %252 = vector.shape_cast %251 : vector<1xf32> to vector<1x1xf32>
    %253 = vector.broadcast %252 : vector<1x1xf32> to vector<1x128xf32>
    %254 = arith.subf %250, %253 : vector<1x128xf32>
    %255 = math.exp %254 : vector<1x128xf32>
    %cst_75 = arith.constant dense<0.000000e+00> : vector<1xf32>
    %256 = vector.multi_reduction <add>, %255, %cst_75 [1] : vector<1x128xf32> to vector<1xf32>
    %257 = vector.shape_cast %256 : vector<1xf32> to vector<1x1xf32>
    %258 = vector.broadcast %257 : vector<1x1xf32> to vector<1x128xf32>
    %259 = arith.divf %255, %258 : vector<1x128xf32>
    %260 = vector.shape_cast %259 : vector<1x128xf32> to vector<1x1x128xf32>
    %c0_76 = arith.constant 0 : index
    %c0_77 = arith.constant 0 : index
    %c0_78 = arith.constant 0 : index
    %261 = vector.load %arg13[%c0_76, %c0_77, %c0_78] : memref<1x1x128xf32, #tpu.memory_space<vmem>>, vector<1x1x128xf32>
    tpu.vector_store %arg13[%c0_76, %c0_77, %c0_78], %260 {strides = array<i32>} : memref<1x1x128xf32, #tpu.memory_space<vmem>>, vector<1x1x128xf32>,
    return
  }
  func.func @transform_0(%arg0: i32) -> (i32, i32, i32) {
    %c0_i32 = arith.constant 0 : i32
    %c0_i32_0 = arith.constant 0 : i32
    %c0_i32_1 = arith.constant 0 : i32
    return %arg0, %c0_i32, %c0_i32_0 : i32, i32, i32
  }
  func.func @transform_1(%arg0: i32) -> (i32, i32, i32) {
    %c0_i32 = arith.constant 0 : i32
    %c0_i32_0 = arith.constant 0 : i32
    %c0_i32_1 = arith.constant 0 : i32
    return %arg0, %c0_i32, %c0_i32_0 : i32, i32, i32
  }
  func.func @transform_2(%arg0: i32) -> (i32, i32, i32) {
    %c0_i32 = arith.constant 0 : i32
    %c0_i32_0 = arith.constant 0 : i32
    %c0_i32_1 = arith.constant 0 : i32
    return %arg0, %c0_i32, %c0_i32_0 : i32, i32, i32
  }
  func.func @transform_3(%arg0: i32) -> (i32, i32, i32) {
    %c0_i32 = arith.constant 0 : i32
    %c0_i32_0 = arith.constant 0 : i32
    %c0_i32_1 = arith.constant 0 : i32
    return %arg0, %c0_i32, %c0_i32_0 : i32, i32, i32
  }
  func.func @transform_4(%arg0: i32) -> (i32, i32, i32) {
    %c0_i32 = arith.constant 0 : i32
    %c0_i32_0 = arith.constant 0 : i32
    %c0_i32_1 = arith.constant 0 : i32
    return %arg0, %c0_i32, %c0_i32_0 : i32, i32, i32
  }
  func.func @transform_5(%arg0: i32) -> (i32, i32, i32, i32) {
    %c0_i32 = arith.constant 0 : i32
    %c0_i32_0 = arith.constant 0 : i32
    %c0_i32_1 = arith.constant 0 : i32
    %c0_i32_2 = arith.constant 0 : i32
    return %arg0, %c0_i32, %c0_i32_0, %c0_i32_1 : i32, i32, i32, i32
  }
  func.func @transform_6(%arg0: i32) -> (i32, i32, i32, i32) {
    %c0_i32 = arith.constant 0 : i32
    %c0_i32_0 = arith.constant 0 : i32
    %c0_i32_1 = arith.constant 0 : i32
    %c0_i32_2 = arith.constant 0 : i32
    return %arg0, %c0_i32, %c0_i32_0, %c0_i32_1 : i32, i32, i32, i32
  }
  func.func @transform_7(%arg0: i32) -> (i32, i32) {
    %c0_i32 = arith.constant 0 : i32
    %c0_i32_0 = arith.constant 0 : i32
    %c0_i32_1 = arith.constant 0 : i32
    return %c0_i32, %c0_i32_0 : i32, i32
  }
  func.func @transform_8(%arg0: i32) -> (i32, i32) {
    %c0_i32 = arith.constant 0 : i32
    %c0_i32_0 = arith.constant 0 : i32
    %c0_i32_1 = arith.constant 0 : i32
    return %c0_i32, %c0_i32_0 : i32, i32
  }
  func.func @transform_9(%arg0: i32) -> (i32, i32) {
    %c0_i32 = arith.constant 0 : i32
    %c0_i32_0 = arith.constant 0 : i32
    %c0_i32_1 = arith.constant 0 : i32
    return %c0_i32, %c0_i32_0 : i32, i32
  }
  func.func @transform_10(%arg0: i32) -> (i32, i32) {
    %c0_i32 = arith.constant 0 : i32
    %c0_i32_0 = arith.constant 0 : i32
    %c0_i32_1 = arith.constant 0 : i32
    return %c0_i32, %c0_i32_0 : i32, i32
  }
  func.func @transform_11(%arg0: i32) -> (i32, i32) {
    %c0_i32 = arith.constant 0 : i32
    %c0_i32_0 = arith.constant 0 : i32
    %c0_i32_1 = arith.constant 0 : i32
    return %c0_i32, %c0_i32_0 : i32, i32
  }
  func.func @transform_12(%arg0: i32) -> (i32, i32, i32) {
    %c0_i32 = arith.constant 0 : i32
    %c0_i32_0 = arith.constant 0 : i32
    %c0_i32_1 = arith.constant 0 : i32
    return %arg0, %c0_i32, %c0_i32_0 : i32, i32, i32
  }
}

</mosaic_0001>

<llo_original>
// kernel: tpu_custom_call.1
$region0: #{tpu_custom_call.1}
  #allocation0 [shape = 'u32[]', space=smem, size = 0x4, offset = 0x4, fixed_abs, tag = 'smem constant byte address 0x4 - core index']
  #allocation1 [shape = 'u32[144,128]{1,0:T(1,128)}', space=vmem, size = 0x12000, scoped, tag = 'internal scratch']
  %s0 = inlined_call_operand.hbm [shape: bf16[2,16,64], index: 0, kind: input, shape index: {}]
  %s1 = inlined_call_operand.vmem [shape: bf16[2,8,64], index: 1, kind: input, shape index: {}]
  %s2 = inlined_call_operand.vmem [shape: f32[2,16,1], index: 2, kind: input, shape index: {}]
  %s3 = inlined_call_operand.hbm [shape: f32[2,1,8], index: 3, kind: input, shape index: {}]
  %s4 = inlined_call_operand.vmem [shape: f32[2,8,1], index: 4, kind: input, shape index: {}]
  %s5 = inlined_call_operand.hbm [shape: bf16[2,3,8,32], index: 5, kind: input, shape index: {}]
  %s6 = inlined_call_operand.vmem [shape: f32[2,3,8,1], index: 6, kind: input, shape index: {}]
  %s7 = inlined_call_operand.vmem [shape: f32[3,64], index: 7, kind: input, shape index: {}]
  %s8 = inlined_call_operand.hbm [shape: f32[3,32], index: 8, kind: input, shape index: {}]
  %s9 = inlined_call_operand.vmem [shape: bf16[256,128], index: 9, kind: input, shape index: {}]
  %s10 = inlined_call_operand.hbm [shape: bf16[64,64], index: 10, kind: input, shape index: {}]
  %s11 = inlined_call_operand.hbm [shape: bf16[64,64], index: 11, kind: input, shape index: {}]
  %s12 = inlined_call_operand.hbm [shape: f32[2,1,128], index: 12, kind: output, shape index: {}]
  %s13 = sld [smem:[#allocation0]]
  $region105: #{tpu_custom_call.1} parent=0
    _
  %s15 = ssub.s32 1, %s13
  %s16 = scalar_select 0, %s15, %s13
  $region1: #{tpu_custom_call.1} parent=0
    #allocation2 [shape = 'u8[8192]{0}', space=vmem, size = 0x2000, scoped, tag = 'input window, operand 0']
    #allocation3 [shape = 's32[2]{0}', space=sflag, size = 0x8, scoped, tag = 'scoped memory for tpu_custom_call.1']
    #allocation4 [shape = 's32[2]{0}', space=sflag, size = 0x8, scoped, tag = 'scoped memory for tpu_custom_call.1']
    #allocation5 [shape = 'u8[1024]{0}', space=vmem, size = 0x400, scoped, tag = 'input window, operand 3']
    #allocation6 [shape = 's32[2]{0}', space=sflag, size = 0x8, scoped, tag = 'scoped memory for tpu_custom_call.1']
    #allocation7 [shape = 'u8[12288]{0}', space=vmem, size = 0x3000, scoped, tag = 'input window, operand 5']
    #allocation8 [shape = 'u8[2048]{0}', space=vmem, size = 0x800, scoped, tag = 'input window, operand 8, single buffered']
    #allocation9 [shape = 's32[1]{0}', space=sflag, size = 0x4, scoped, tag = 'scoped memory for tpu_custom_call.1']
    #allocation10 [shape = 'u8[16384]{0}', space=vmem, size = 0x4000, scoped, tag = 'input window, operand 10, single buffered']
    #allocation11 [shape = 'u8[16384]{0}', space=vmem, size = 0x4000, scoped, tag = 'input window, operand 11, single buffered']
    #allocation12 [shape = 's32[1]{0}', space=sflag, size = 0x4, scoped, tag = 'scoped memory for tpu_custom_call.1']
    #allocation13 [shape = 'u8[1024]{0}', space=vmem, size = 0x400, scoped, tag = 'output window, operand 0']
    %17 = vsyncpa [#allocation3], 0
    %s18 = scalar_lea.sflag [#allocation3], 1
    %19 = vsyncpa %s18, 0
    %20 = vsyncpa [#allocation6], 0
    %s21 = scalar_lea.sflag [#allocation6], 1
    %22 = vsyncpa %s21, 0
    %23 = vsyncpa [#allocation9], 0
    %24 = vsyncpa [#allocation12], 0
    %25 = vsyncpa [#allocation4], 0
    %s26 = scalar_lea.sflag [#allocation4], 1
    %27 = vsyncpa %s26, 0
    loop: start=0, step=1, limit=4
    $region2: #{tpu_custom_call.1} parent=1 // loop_pre_header
      _
    $region3: #{tpu_custom_call.1} parent=1 // loop_header
      %s29 = sphi 0, %s33
      %p30 = scmp.ge.s32.totalorder %s29, 4
      %s39 = sphi 0, %s41
      %s42 = sphi 0, %s39
      %s43 = sphi 0, %s42
      %s59 = sphi 0, %s43
      %s65 = sphi 0, %s67
      %s68 = sphi 0, %s65
      %s69 = sphi 0, %s68
      %s85 = sphi 0, %s69
      %s91 = sphi 0, %s93
      %s94 = sphi 0, %s91
      %s95 = sphi 0, %s94
      %s111 = sphi 0, %s95
      %s117 = sphi 0, %s119
      %s120 = sphi 0, %s117
      %s121 = sphi 0, %s120
      %s137 = sphi 0, %s121
      %s143 = sphi 0, %s145
      %s146 = sphi 0, %s143
      %s147 = sphi 0, %s146
      %s163 = sphi 0, %s147
      %s169 = sphi 0, %s171
      %s172 = sphi 0, %s169
      %s173 = sphi 0, %s172
      %s189 = sphi 0, %s173
      %s195 = sphi 0, %s197
      %s198 = sphi 0, %s195
      %s199 = sphi 0, %s198
      %s215 = sphi 0, %s199
      %s219 = sphi 0, %s219
      %s221 = sphi 0, %s219
      %s222 = sphi 0, %s221
      %s236 = sphi 0, %s222
      %s240 = sphi 0, %s240
      %s242 = sphi 0, %s240
      %s243 = sphi 0, %s242
      %s257 = sphi 0, %s243
      %s261 = sphi 0, %s261
      %s263 = sphi 0, %s261
      %s264 = sphi 0, %s263
      %s278 = sphi 0, %s264
      %s282 = sphi 0, %s282
      %s284 = sphi 0, %s282
      %s285 = sphi 0, %s284
      %s299 = sphi 0, %s285
      %s303 = sphi 0, %s303
      %s305 = sphi 0, %s303
      %s306 = sphi 0, %s305
      %s320 = sphi 0, %s306
      %s326 = sphi 0, %s328
      %s329 = sphi 0, %s326
      %s330 = sphi 0, %s329
      %s346 = sphi 0, %s330
    $region4: #{tpu_custom_call.1} parent=1 // loop_header_branch
      %32 = sbr.rel (%p30) target = $region8
    $region5: #{tpu_custom_call.1} parent=1 // loop_body
      %s34 = ssub.s32 %s29, 1
      %s35 = ssub.s32 %s29, 2
      %s36 = sadd.s32 %s29, 1
      %s37 = ssub.s32 %s29, %s36
      %p38 = scmp.eq.s32.totalorder %s37, 0
      %s40 = sadd.s32 %s39, 1
      %s41 = scalar_select %p38, %s39, %s40
      %p44 = pneg %p38
      %p45 = scmp.eq.s32.totalorder %s29, 1
      %p46 = por %p44, %p45
      %p47 = scmp.ne.s32.totalorder %s39, %s42
      %p48 = scmp.eq.s32.totalorder %s29, 0
      %p49 = por %p47, %p48
      %p50 = scmp.ne.s32.totalorder %s39, %s42
      %p51 = scmp.eq.s32.totalorder %s34, 1
      %p52 = por %p50, %p51
      %p53 = scmp.ne.s32.totalorder %s42, %s43
      %p54 = scmp.eq.s32.totalorder %s34, 0
      %p55 = por %p53, %p54
      %p56 = scmp.ne.s32.totalorder %s42, %s43
      %p57 = scmp.eq.s32.totalorder %s35, 1
      %p58 = por %p56, %p57
      %p60 = scmp.ne.s32.totalorder %s43, %s59
      %p61 = scmp.eq.s32.totalorder %s35, 0
      %p62 = por %p60, %p61
      %s63 = ssub.s32 %s29, %s36
      %p64 = scmp.eq.s32.totalorder %s63, 0
      %s66 = sadd.s32 %s65, 1
      %s67 = scalar_select %p64, %s65, %s66
      %p70 = pneg %p64
      %p71 = scmp.eq.s32.totalorder %s29, 1
      %p72 = por %p70, %p71
      %p73 = scmp.ne.s32.totalorder %s65, %s68
      %p74 = scmp.eq.s32.totalorder %s29, 0
      %p75 = por %p73, %p74
      %p76 = scmp.ne.s32.totalorder %s65, %s68
      %p77 = scmp.eq.s32.totalorder %s34, 1
      %p78 = por %p76, %p77
      %p79 = scmp.ne.s32.totalorder %s68, %s69
      %p80 = scmp.eq.s32.totalorder %s34, 0
      %p81 = por %p79, %p80
      %p82 = scmp.ne.s32.totalorder %s68, %s69
      %p83 = scmp.eq.s32.totalorder %s35, 1
      %p84 = por %p82, %p83
      %p86 = scmp.ne.s32.totalorder %s69, %s85
      %p87 = scmp.eq.s32.totalorder %s35, 0
      %p88 = por %p86, %p87
      %s89 = ssub.s32 %s29, %s36
      %p90 = scmp.eq.s32.totalorder %s89, 0
      %s92 = sadd.s32 %s91, 1
      %s93 = scalar_select %p90, %s91, %s92
      %p96 = pneg %p90
      %p97 = scmp.eq.s32.totalorder %s29, 1
      %p98 = por %p96, %p97
      %p99 = scmp.ne.s32.totalorder %s91, %s94
      %p100 = scmp.eq.s32.totalorder %s29, 0
      %p101 = por %p99, %p100
      %p102 = scmp.ne.s32.totalorder %s91, %s94
      %p103 = scmp.eq.s32.totalorder %s34, 1
      %p104 = por %p102, %p103
      %p105 = scmp.ne.s32.totalorder %s94, %s95
      %p106 = scmp.eq.s32.totalorder %s34, 0
      %p107 = por %p105, %p106
      %p108 = scmp.ne.s32.totalorder %s94, %s95
      %p109 = scmp.eq.s32.totalorder %s35, 1
      %p110 = por %p108, %p109
      %p112 = scmp.ne.s32.totalorder %s95, %s111
      %p113 = scmp.eq.s32.totalorder %s35, 0
      %p114 = por %p112, %p113
      %s115 = ssub.s32 %s29, %s36
      %p116 = scmp.eq.s32.totalorder %s115, 0
      %s118 = sadd.s32 %s117, 1
      %s119 = scalar_select %p116, %s117, %s118
      %p122 = pneg %p116
      %p123 = scmp.eq.s32.totalorder %s29, 1
      %p124 = por %p122, %p123
      %p125 = scmp.ne.s32.totalorder %s117, %s120
      %p126 = scmp.eq.s32.totalorder %s29, 0
      %p127 = por %p125, %p126
      %p128 = scmp.ne.s32.totalorder %s117, %s120
      %p129 = scmp.eq.s32.totalorder %s34, 1
      %p130 = por %p128, %p129
      %p131 = scmp.ne.s32.totalorder %s120, %s121
      %p132 = scmp.eq.s32.totalorder %s34, 0
      %p133 = por %p131, %p132
      %p134 = scmp.ne.s32.totalorder %s120, %s121
      %p135 = scmp.eq.s32.totalorder %s35, 1
      %p136 = por %p134, %p135
      %p138 = scmp.ne.s32.totalorder %s121, %s137
      %p139 = scmp.eq.s32.totalorder %s35, 0
      %p140 = por %p138, %p139
      %s141 = ssub.s32 %s29, %s36
      %p142 = scmp.eq.s32.totalorder %s141, 0
      %s144 = sadd.s32 %s143, 1
      %s145 = scalar_select %p142, %s143, %s144
      %p148 = pneg %p142
      %p149 = scmp.eq.s32.totalorder %s29, 1
      %p150 = por %p148, %p149
      %p151 = scmp.ne.s32.totalorder %s143, %s146
      %p152 = scmp.eq.s32.totalorder %s29, 0
      %p153 = por %p151, %p152
      %p154 = scmp.ne.s32.totalorder %s143, %s146
      %p155 = scmp.eq.s32.totalorder %s34, 1
      %p156 = por %p154, %p155
      %p157 = scmp.ne.s32.totalorder %s146, %s147
      %p158 = scmp.eq.s32.totalorder %s34, 0
      %p159 = por %p157, %p158
      %p160 = scmp.ne.s32.totalorder %s146, %s147
      %p161 = scmp.eq.s32.totalorder %s35, 1
      %p162 = por %p160, %p161
      %p164 = scmp.ne.s32.totalorder %s147, %s163
      %p165 = scmp.eq.s32.totalorder %s35, 0
      %p166 = por %p164, %p165
      %s167 = ssub.s32 %s29, %s36
      %p168 = scmp.eq.s32.totalorder %s167, 0
      %s170 = sadd.s32 %s169, 1
      %s171 = scalar_select %p168, %s169, %s170
      %p174 = pneg %p168
      %p175 = scmp.eq.s32.totalorder %s29, 1
      %p176 = por %p174, %p175
      %p177 = scmp.ne.s32.totalorder %s169, %s172
      %p178 = scmp.eq.s32.totalorder %s29, 0
      %p179 = por %p177, %p178
      %p180 = scmp.ne.s32.totalorder %s169, %s172
      %p181 = scmp.eq.s32.totalorder %s34, 1
      %p182 = por %p180, %p181
      %p183 = scmp.ne.s32.totalorder %s172, %s173
      %p184 = scmp.eq.s32.totalorder %s34, 0
      %p185 = por %p183, %p184
      %p186 = scmp.ne.s32.totalorder %s172, %s173
      %p187 = scmp.eq.s32.totalorder %s35, 1
      %p188 = por %p186, %p187
      %p190 = scmp.ne.s32.totalorder %s173, %s189
      %p191 = scmp.eq.s32.totalorder %s35, 0
      %p192 = por %p190, %p191
      %s193 = ssub.s32 %s29, %s36
      %p194 = scmp.eq.s32.totalorder %s193, 0
      %s196 = sadd.s32 %s195, 1
      %s197 = scalar_select %p194, %s195, %s196
      %p200 = pneg %p194
      %p201 = scmp.eq.s32.totalorder %s29, 1
      %p202 = por %p200, %p201
      %p203 = scmp.ne.s32.totalorder %s195, %s198
      %p204 = scmp.eq.s32.totalorder %s29, 0
      %p205 = por %p203, %p204
      %p206 = scmp.ne.s32.totalorder %s195, %s198
      %p207 = scmp.eq.s32.totalorder %s34, 1
      %p208 = por %p206, %p207
      %p209 = scmp.ne.s32.totalorder %s198, %s199
      %p210 = scmp.eq.s32.totalorder %s34, 0
      %p211 = por %p209, %p210
      %p212 = scmp.ne.s32.totalorder %s198, %s199
      %p213 = scmp.eq.s32.totalorder %s35, 1
      %p214 = por %p212, %p213
      %p216 = scmp.ne.s32.totalorder %s199, %s215
      %p217 = scmp.eq.s32.totalorder %s35, 0
      %p218 = por %p216, %p217
      %s220 = sadd.s32 %s219, 1
      %p223 = scmp.eq.s32.totalorder %s29, 1
      %p224 = scmp.ne.s32.totalorder %s219, %s221
      %p225 = scmp.eq.s32.totalorder %s29, 0
      %p226 = por %p224, %p225
      %p227 = scmp.ne.s32.totalorder %s219, %s221
      %p228 = scmp.eq.s32.totalorder %s34, 1
      %p229 = por %p227, %p228
      %p230 = scmp.ne.s32.totalorder %s221, %s222
      %p231 = scmp.eq.s32.totalorder %s34, 0
      %p232 = por %p230, %p231
      %p233 = scmp.ne.s32.totalorder %s221, %s222
      %p234 = scmp.eq.s32.totalorder %s35, 1
      %p235 = por %p233, %p234
      %p237 = scmp.ne.s32.totalorder %s222, %s236
      %p238 = scmp.eq.s32.totalorder %s35, 0
      %p239 = por %p237, %p238
      %s241 = sadd.s32 %s240, 1
      %p244 = scmp.eq.s32.totalorder %s29, 1
      %p245 = scmp.ne.s32.totalorder %s240, %s242
      %p246 = scmp.eq.s32.totalorder %s29, 0
      %p247 = por %p245, %p246
      %p248 = scmp.ne.s32.totalorder %s240, %s242
      %p249 = scmp.eq.s32.totalorder %s34, 1
      %p250 = por %p248, %p249
      %p251 = scmp.ne.s32.totalorder %s242, %s243
      %p252 = scmp.eq.s32.totalorder %s34, 0
      %p253 = por %p251, %p252
      %p254 = scmp.ne.s32.totalorder %s242, %s243
      %p255 = scmp.eq.s32.totalorder %s35, 1
      %p256 = por %p254, %p255
      %p258 = scmp.ne.s32.totalorder %s243, %s257
      %p259 = scmp.eq.s32.totalorder %s35, 0
      %p260 = por %p258, %p259
      %s262 = sadd.s32 %s261, 1
      %p265 = scmp.eq.s32.totalorder %s29, 1
      %p266 = scmp.ne.s32.totalorder %s261, %s263
      %p267 = scmp.eq.s32.totalorder %s29, 0
      %p268 = por %p266, %p267
      %p269 = scmp.ne.s32.totalorder %s261, %s263
      %p270 = scmp.eq.s32.totalorder %s34, 1
      %p271 = por %p269, %p270
      %p272 = scmp.ne.s32.totalorder %s263, %s264
      %p273 = scmp.eq.s32.totalorder %s34, 0
      %p274 = por %p272, %p273
      %p275 = scmp.ne.s32.totalorder %s263, %s264
      %p276 = scmp.eq.s32.totalorder %s35, 1
      %p277 = por %p275, %p276
      %p279 = scmp.ne.s32.totalorder %s264, %s278
      %p280 = scmp.eq.s32.totalorder %s35, 0
      %p281 = por %p279, %p280
      %s283 = sadd.s32 %s282, 1
      %p286 = scmp.eq.s32.totalorder %s29, 1
      %p287 = scmp.ne.s32.totalorder %s282, %s284
      %p288 = scmp.eq.s32.totalorder %s29, 0
      %p289 = por %p287, %p288
      %p290 = scmp.ne.s32.totalorder %s282, %s284
      %p291 = scmp.eq.s32.totalorder %s34, 1
      %p292 = por %p290, %p291
      %p293 = scmp.ne.s32.totalorder %s284, %s285
      %p294 = scmp.eq.s32.totalorder %s34, 0
      %p295 = por %p293, %p294
      %p296 = scmp.ne.s32.totalorder %s284, %s285
      %p297 = scmp.eq.s32.totalorder %s35, 1
      %p298 = por %p296, %p297
      %p300 = scmp.ne.s32.totalorder %s285, %s299
      %p301 = scmp.eq.s32.totalorder %s35, 0
      %p302 = por %p300, %p301
      %s304 = sadd.s32 %s303, 1
      %p307 = scmp.eq.s32.totalorder %s29, 1
      %p308 = scmp.ne.s32.totalorder %s303, %s305
      %p309 = scmp.eq.s32.totalorder %s29, 0
      %p310 = por %p308, %p309
      %p311 = scmp.ne.s32.totalorder %s303, %s305
      %p312 = scmp.eq.s32.totalorder %s34, 1
      %p313 = por %p311, %p312
      %p314 = scmp.ne.s32.totalorder %s305, %s306
      %p315 = scmp.eq.s32.totalorder %s34, 0
      %p316 = por %p314, %p315
      %p317 = scmp.ne.s32.totalorder %s305, %s306
      %p318 = scmp.eq.s32.totalorder %s35, 1
      %p319 = por %p317, %p318
      %p321 = scmp.ne.s32.totalorder %s306, %s320
      %p322 = scmp.eq.s32.totalorder %s35, 0
      %p323 = por %p321, %p322
      %s324 = ssub.s32 %s29, %s36
      %p325 = scmp.eq.s32.totalorder %s324, 0
      %s327 = sadd.s32 %s326, 1
      %s328 = scalar_select %p325, %s326, %s327
      %p331 = pneg %p325
      %p332 = scmp.eq.s32.totalorder %s29, 1
      %p333 = por %p331, %p332
      %p334 = scmp.ne.s32.totalorder %s326, %s329
      %p335 = scmp.eq.s32.totalorder %s29, 0
      %p336 = por %p334, %p335
      %p337 = scmp.ne.s32.totalorder %s326, %s329
      %p338 = scmp.eq.s32.totalorder %s34, 1
      %p339 = por %p337, %p338
      %p340 = scmp.ne.s32.totalorder %s329, %s330
      %p341 = scmp.eq.s32.totalorder %s34, 0
      %p342 = por %p340, %p341
      %p343 = scmp.ne.s32.totalorder %s329, %s330
      %p344 = scmp.eq.s32.totalorder %s35, 1
      %p345 = por %p343, %p344
      %p347 = scmp.ne.s32.totalorder %s330, %s346
      %p348 = scmp.eq.s32.totalorder %s35, 0
      %p349 = por %p347, %p348
      %p350 = scmp.le.s32.totalorder 1, %s29
      %p351 = scmp.lt.s32.totalorder %s29, 3
      %p352 = pnand %p350, %p351
      %p353 = pneg %p352
      // Predicated region
      $region9: #{tpu_custom_call.1} parent=5 // pred_check
        _
      $region10: #{tpu_custom_call.1} parent=5 // pred_check_branch
        %355 = sbr.rel (%p352) target = $region12
      $region11: #{tpu_custom_call.1} parent=5 // pred_region
        %s356 = ssub.s32 %s29, 1
        // Predicated region
        $region13: #{tpu_custom_call.1} parent=11 // pred_check
          %p357 = pneg %p232
        $region14: #{tpu_custom_call.1} parent=11 // pred_check_branch
          %359 = sbr.rel (%p357) target = $region16
        $region15: #{tpu_custom_call.1} parent=11 // pred_region
          _
        $region16: #{tpu_custom_call.1} parent=11 // pred_fallthru
          _
        // Predicated region
        $region17: #{tpu_custom_call.1} parent=11 // pred_check
          %p360 = pneg %p253
        $region18: #{tpu_custom_call.1} parent=11 // pred_check_branch
          %362 = sbr.rel (%p360) target = $region20
        $region19: #{tpu_custom_call.1} parent=11 // pred_region
          %s364 = ssub.s32 64, 64
          %365 = vsyncadd [#allocation9], %s364
          %s367 = sshll.u32 [#allocation8], 4
          %s368 = int_to_ptr.vmem [resolvable:$true] %s367
          %370 = dma.hbm_to_vmem [thread:$0]  %s8, 64, %s368, [#allocation9]
        $region20: #{tpu_custom_call.1} parent=11 // pred_fallthru
          _
        // Predicated region
        $region21: #{tpu_custom_call.1} parent=11 // pred_check
          %p371 = pneg %p274
        $region22: #{tpu_custom_call.1} parent=11 // pred_check_branch
          %373 = sbr.rel (%p371) target = $region24
        $region23: #{tpu_custom_call.1} parent=11 // pred_region
          _
        $region24: #{tpu_custom_call.1} parent=11 // pred_fallthru
          _
        // Predicated region
        $region25: #{tpu_custom_call.1} parent=11 // pred_check
          %p374 = pneg %p295
        $region26: #{tpu_custom_call.1} parent=11 // pred_check_branch
          %376 = sbr.rel (%p374) target = $region28
        $region27: #{tpu_custom_call.1} parent=11 // pred_region
          %s378 = ssub.s32 512, 512
          %379 = vsyncadd [#allocation9], %s378
          %s380 = sshll.u32 [#allocation10], 4
          %s381 = int_to_ptr.vmem [resolvable:$true] %s380
          %386 = dma.hbm_to_vmem [thread:$0]  %s10, 512, %s381, [#allocation9], 64, 64, 4
        $region28: #{tpu_custom_call.1} parent=11 // pred_fallthru
          _
        // Predicated region
        $region29: #{tpu_custom_call.1} parent=11 // pred_check
          %p387 = pneg %p316
        $region30: #{tpu_custom_call.1} parent=11 // pred_check_branch
          %389 = sbr.rel (%p387) target = $region32
        $region31: #{tpu_custom_call.1} parent=11 // pred_region
          %s391 = ssub.s32 512, 512
          %392 = vsyncadd [#allocation12], %s391
          %s393 = sshll.u32 [#allocation11], 4
          %s394 = int_to_ptr.vmem [resolvable:$true] %s393
          %399 = dma.hbm_to_vmem [thread:$0]  %s11, 512, %s394, [#allocation12], 64, 64, 4
        $region32: #{tpu_custom_call.1} parent=11 // pred_fallthru
          _
      $region12: #{tpu_custom_call.1} parent=5 // pred_fallthru
        _
      %p400 = scmp.lt.s32.totalorder %s29, 2
      // Predicated region
      $region33: #{tpu_custom_call.1} parent=5 // pred_check
        %p401 = pneg %p400
      $region34: #{tpu_custom_call.1} parent=5 // pred_check_branch
        %403 = sbr.rel (%p401) target = $region36
      $region35: #{tpu_custom_call.1} parent=5 // pred_region
        // Predicated region
        $region37: #{tpu_custom_call.1} parent=35 // pred_check
          %p404 = pneg %p49
        $region38: #{tpu_custom_call.1} parent=35 // pred_check_branch
          %406 = sbr.rel (%p404) target = $region40
        $region39: #{tpu_custom_call.1} parent=35 // pred_region
          %s407 = sand.u32 %s39, 1
          %s408 = scalar_lea.sflag [#allocation3], %s407
          %s409 = sand.u32 %s39, 1
          %s410 = smul.addr %s409, 8
          %s411 = scalar_lea.vmem [#allocation2], %s410
          %s413 = ssub.s32 128, 128
          %414 = vsyncadd %s408, %s413
          %s415 = smul.addr %s29, 2
          %s416 = smul.addr %s415, 64
          %s417 = scalar_lea.hbm %s0, %s416
          %s418 = sshll.u32 %s411, 4
          %s419 = int_to_ptr.vmem [resolvable:$true] %s418
          %424 = dma.hbm_to_vmem [thread:$0]  %s417, 128, %s419, %s408, 64, 64, 4
        $region40: #{tpu_custom_call.1} parent=35 // pred_fallthru
          _
        // Predicated region
        $region41: #{tpu_custom_call.1} parent=35 // pred_check
          %p425 = pneg %p75
        $region42: #{tpu_custom_call.1} parent=35 // pred_check_branch
          %427 = sbr.rel (%p425) target = $region44
        $region43: #{tpu_custom_call.1} parent=35 // pred_region
          %p428 = scmp.lt.s32.totalorder %s29, 1
          %s429 = scalar_select %p428, %s29, 1
          %s430 = smul.addr %s429, 4
          %s431 = scalar_lea.vmem %s1, %s430
        $region44: #{tpu_custom_call.1} parent=35 // pred_fallthru
          _
        // Predicated region
        $region45: #{tpu_custom_call.1} parent=35 // pred_check
          %p432 = pneg %p101
        $region46: #{tpu_custom_call.1} parent=35 // pred_check_branch
          %434 = sbr.rel (%p432) target = $region48
        $region47: #{tpu_custom_call.1} parent=35 // pred_region
          %p435 = scmp.lt.s32.totalorder %s29, 1
          %s436 = scalar_select %p435, %s29, 1
          %s437 = smul.addr %s436, 2
          %s438 = smul.addr %s437, 8
          %s439 = scalar_lea.vmem %s2, %s438
        $region48: #{tpu_custom_call.1} parent=35 // pred_fallthru
          _
        // Predicated region
        $region49: #{tpu_custom_call.1} parent=35 // pred_check
          %p440 = pneg %p127
        $region50: #{tpu_custom_call.1} parent=35 // pred_check_branch
          %442 = sbr.rel (%p440) target = $region52
        $region51: #{tpu_custom_call.1} parent=35 // pred_region
          %s443 = sand.u32 %s29, 1
          %s444 = scalar_lea.sflag [#allocation6], %s443
          %s445 = sand.u32 %s117, 1
          %s446 = scalar_lea.vmem [#allocation5], %s445
          %s448 = ssub.s32 16, 16
          %449 = vsyncadd %s444, %s448
          %s450 = smul.addr %s29, 16
          %s451 = scalar_lea.hbm %s3, %s450
          %s453 = sshll.u32 %s446, 4
          %s454 = int_to_ptr.vmem [resolvable:$true] %s453
          %456 = dma.hbm_to_vmem [thread:$0]  %s451, 16, %s454, %s444
        $region52: #{tpu_custom_call.1} parent=35 // pred_fallthru
          _
        // Predicated region
        $region53: #{tpu_custom_call.1} parent=35 // pred_check
          %p457 = pneg %p153
        $region54: #{tpu_custom_call.1} parent=35 // pred_check_branch
          %459 = sbr.rel (%p457) target = $region56
        $region55: #{tpu_custom_call.1} parent=35 // pred_region
          %p460 = scmp.lt.s32.totalorder %s29, 1
          %s461 = scalar_select %p460, %s29, 1
          %s462 = smul.addr %s461, 8
          %s463 = scalar_lea.vmem %s4, %s462
        $region56: #{tpu_custom_call.1} parent=35 // pred_fallthru
          _
        // Predicated region
        $region57: #{tpu_custom_call.1} parent=35 // pred_check
          %p464 = pneg %p179
        $region58: #{tpu_custom_call.1} parent=35 // pred_check_branch
          %466 = sbr.rel (%p464) target = $region60
        $region59: #{tpu_custom_call.1} parent=35 // pred_region
          %s467 = sand.u32 %s29, 1
          %s468 = scalar_lea.sflag [#allocation6], %s467
          %s469 = sand.u32 %s169, 1
          %s470 = smul.addr %s469, 12
          %s471 = scalar_lea.vmem [#allocation7], %s470
          %s473 = ssub.s32 192, 192
          %474 = vsyncadd %s468, %s473
          %s475 = smul.addr %s29, 3
          %s476 = smul.addr %s475, 64
          %s477 = scalar_lea.hbm %s5, %s476
          %s478 = sshll.u32 %s471, 4
          %s479 = int_to_ptr.vmem [resolvable:$true] %s478
          %484 = dma.hbm_to_vmem [thread:$0]  %s477, 192, %s479, %s468, 64, 64, 4
        $region60: #{tpu_custom_call.1} parent=35 // pred_fallthru
          _
        // Predicated region
        $region61: #{tpu_custom_call.1} parent=35 // pred_check
          %p485 = pneg %p205
        $region62: #{tpu_custom_call.1} parent=35 // pred_check_branch
          %487 = sbr.rel (%p485) target = $region64
        $region63: #{tpu_custom_call.1} parent=35 // pred_region
          %p488 = scmp.lt.s32.totalorder %s29, 1
          %s489 = scalar_select %p488, %s29, 1
          %s490 = smul.addr %s489, 3
          %s491 = smul.addr %s490, 8
          %s492 = scalar_lea.vmem %s6, %s491
        $region64: #{tpu_custom_call.1} parent=35 // pred_fallthru
          _
      $region36: #{tpu_custom_call.1} parent=5 // pred_fallthru
        _
      %p493 = scmp.le.s32.totalorder 1, %s29
      %p494 = scmp.lt.s32.totalorder %s29, 3
      %p495 = pnand %p493, %p494
      %p496 = pneg %p495
      // Predicated region
      $region65: #{tpu_custom_call.1} parent=5 // pred_check
        _
      $region66: #{tpu_custom_call.1} parent=5 // pred_check_branch
        %498 = sbr.rel (%p495) target = $region68
      $region67: #{tpu_custom_call.1} parent=5 // pred_region
        %s499 = ssub.s32 %s29, 1
        %s500 = sand.u32 %s42, 1
        %s501 = scalar_lea.sflag [#allocation3], %s500
        %s502 = sand.u32 %s42, 1
        %s503 = smul.addr %s502, 8
        %s504 = scalar_lea.vmem [#allocation2], %s503
        // Predicated region
        $region69: #{tpu_custom_call.1} parent=67 // pred_check
          %p505 = pneg %p55
        $region70: #{tpu_custom_call.1} parent=67 // pred_check_branch
          %507 = sbr.rel (%p505) target = $region72
        $region71: #{tpu_custom_call.1} parent=67 // pred_region
          %508 = dma.done %s501, 128
        $region72: #{tpu_custom_call.1} parent=67 // pred_fallthru
          _
        %s509 = sand.u32 %s34, 1
        %s510 = scalar_lea.sflag [#allocation6], %s509
        %s511 = sand.u32 %s120, 1
        %s512 = scalar_lea.vmem [#allocation5], %s511
        // Predicated region
        $region73: #{tpu_custom_call.1} parent=67 // pred_check
          %p513 = pneg %p133
        $region74: #{tpu_custom_call.1} parent=67 // pred_check_branch
          %515 = sbr.rel (%p513) target = $region76
        $region75: #{tpu_custom_call.1} parent=67 // pred_region
          %516 = dma.done %s510, 16
        $region76: #{tpu_custom_call.1} parent=67 // pred_fallthru
          _
        %s517 = sand.u32 %s34, 1
        %s518 = scalar_lea.sflag [#allocation6], %s517
        %s519 = sand.u32 %s172, 1
        %s520 = smul.addr %s519, 12
        %s521 = scalar_lea.vmem [#allocation7], %s520
        // Predicated region
        $region77: #{tpu_custom_call.1} parent=67 // pred_check
          %p522 = pneg %p185
        $region78: #{tpu_custom_call.1} parent=67 // pred_check_branch
          %524 = sbr.rel (%p522) target = $region80
        $region79: #{tpu_custom_call.1} parent=67 // pred_region
          %525 = dma.done %s518, 192
        $region80: #{tpu_custom_call.1} parent=67 // pred_fallthru
          _
        // Predicated region
        $region81: #{tpu_custom_call.1} parent=67 // pred_check
          %p526 = pneg %p253
        $region82: #{tpu_custom_call.1} parent=67 // pred_check_branch
          %528 = sbr.rel (%p526) target = $region84
        $region83: #{tpu_custom_call.1} parent=67 // pred_region
          %529 = dma.done [#allocation9], 64
        $region84: #{tpu_custom_call.1} parent=67 // pred_fallthru
          _
        // Predicated region
        $region85: #{tpu_custom_call.1} parent=67 // pred_check
          %p530 = pneg %p295
        $region86: #{tpu_custom_call.1} parent=67 // pred_check_branch
          %532 = sbr.rel (%p530) target = $region88
        $region87: #{tpu_custom_call.1} parent=67 // pred_region
          %533 = dma.done [#allocation9], 512
        $region88: #{tpu_custom_call.1} parent=67 // pred_fallthru
          _
        // Predicated region
        $region89: #{tpu_custom_call.1} parent=67 // pred_check
          %p534 = pneg %p316
        $region90: #{tpu_custom_call.1} parent=67 // pred_check_branch
          %536 = sbr.rel (%p534) target = $region92
        $region91: #{tpu_custom_call.1} parent=67 // pred_region
          %537 = dma.done [#allocation12], 512
        $region92: #{tpu_custom_call.1} parent=67 // pred_fallthru
          _
        %s538 = sand.u32 %s42, 1
        %s539 = scalar_lea.sflag [#allocation3], %s538
        %s540 = sand.u32 %s42, 1
        %s541 = smul.addr %s540, 8
        %s542 = scalar_lea.vmem [#allocation2], %s541
        %p543 = pneg %p55
        %p544 = pneg %p52
        %p545 = scmp.lt.s32.totalorder %s34, 1
        %s546 = scalar_select %p545, %s34, 1
        %s547 = smul.addr %s546, 4
        %s548 = scalar_lea.vmem %s1, %s547
        %p549 = pneg %p81
        %p550 = pneg %p78
        %p551 = scmp.lt.s32.totalorder %s34, 1
        %s552 = scalar_select %p551, %s34, 1
        %s553 = smul.addr %s552, 2
        %s554 = smul.addr %s553, 8
        %s555 = scalar_lea.vmem %s2, %s554
        %p556 = pneg %p107
        %p557 = pneg %p104
        %s558 = sand.u32 %s34, 1
        %s559 = scalar_lea.sflag [#allocation6], %s558
        %s560 = sand.u32 %s120, 1
        %s561 = scalar_lea.vmem [#allocation5], %s560
        %p562 = pneg %p133
        %p563 = pneg %p130
        %p564 = scmp.lt.s32.totalorder %s34, 1
        %s565 = scalar_select %p564, %s34, 1
        %s566 = smul.addr %s565, 8
        %s567 = scalar_lea.vmem %s4, %s566
        %p568 = pneg %p159
        %p569 = pneg %p156
        %s570 = sand.u32 %s34, 1
        %s571 = scalar_lea.sflag [#allocation6], %s570
        %s572 = sand.u32 %s172, 1
        %s573 = smul.addr %s572, 12
        %s574 = scalar_lea.vmem [#allocation7], %s573
        %p575 = pneg %p185
        %p576 = pneg %p182
        %p577 = scmp.lt.s32.totalorder %s34, 1
        %s578 = scalar_select %p577, %s34, 1
        %s579 = smul.addr %s578, 3
        %s580 = smul.addr %s579, 8
        %s581 = scalar_lea.vmem %s6, %s580
        %p582 = pneg %p211
        %p583 = pneg %p208
        %p584 = pneg %p232
        %p585 = pneg %p229
        %p586 = pneg %p253
        %p587 = pneg %p250
        %p588 = pneg %p274
        %p589 = pneg %p271
        %p590 = pneg %p295
        %p591 = pneg %p292
        %p592 = pneg %p316
        %p593 = pneg %p313
        %p594 = pneg %p342
        %p595 = pneg %p339
        %s596 = sand.u32 %s329, 1
        %s597 = scalar_lea.sflag [#allocation4], %s596
        %s598 = sand.u32 %s329, 1
        %s599 = scalar_lea.vmem [#allocation13], %s598
        %p600 = scmp.lt.s32.totalorder %s34, 1
        %s601 = scalar_select %p600, %s34, 1
        %s602 = smul.addr %s601, 4
        %s603 = scalar_lea.vmem %s1, %s602
        %p604 = scmp.lt.s32.totalorder %s34, 1
        %s605 = scalar_select %p604, %s34, 1
        %s606 = smul.addr %s605, 2
        %s607 = smul.addr %s606, 8
        %s608 = scalar_lea.vmem %s2, %s607
        %p609 = scmp.lt.s32.totalorder %s34, 1
        %s610 = scalar_select %p609, %s34, 1
        %s611 = smul.addr %s610, 8
        %s612 = scalar_lea.vmem %s4, %s611
        %p613 = scmp.lt.s32.totalorder %s34, 1
        %s614 = scalar_select %p613, %s34, 1
        %s615 = smul.addr %s614, 3
        %s616 = smul.addr %s615, 8
        %s617 = scalar_lea.vmem %s6, %s616
        %v619 = vld [vmem:[%s504] sm:$0xf]
        %v620 = vld [vmem:[%s504 + $0x4] sm:$0xf]
        %v621 = vld [vmem:[%s603] sm:$0xf]
        %v622 = vld [vmem:[%s608] sm:$0xff]
        %v623 = vld [vmem:[%s608 + $0x8] sm:$0xff]
        %v624 = vld [vmem:[%s512] sm:$0x1]
        %v625 = vld [vmem:[%s612] sm:$0xff]
        %v626 = vld [vmem:[%s521] sm:$0xf]
        %v627 = vld [vmem:[%s521 + $0x4] sm:$0xf]
        %v628 = vld [vmem:[%s521 + $0x8] sm:$0xf]
        %v629 = vld [vmem:[%s617] sm:$0xff]
        %v630 = vld [vmem:[%s617 + $0x8] sm:$0xff]
        %v631 = vld [vmem:[%s617 + $0x10] sm:$0xff]
        %v632 = vld [vmem:[%s7] sm:$0x1]
        %v633 = vld [vmem:[%s7 + $0x1] sm:$0x1]
        %v634 = vld [vmem:[%s7 + $0x2] sm:$0x1]
        %v635 = vld [vmem:[#allocation8] sm:$0x1]
        %v636 = vld [vmem:[#allocation8 + $0x1] sm:$0x1]
        %v637 = vld [vmem:[#allocation8 + $0x2] sm:$0x1]
        %v638 = vunpack.c.l.bf16 %v619
        %v639 = vunpack.c.l.bf16 %v620
        %v640 = vunpack.c.l.bf16 %v621
        %v641 = vlaneseq
        %v642 = vshrl.u32 %v641, 7
        %v643 = vsub.s32 0, %v642
        %v644 = vrot.slane %v632, %v643
        %v645 = vmul.f32 %v638, %v644
        %v646 = vmul.f32 %v639, %v644
        %vm647 = vcmask 523264
        %v648 = vsel %vm647, %v645, 0.0
        %649 = vadd.xlane.f32.xlu0 %v648
        %v650 = vpop.xlane.xlu0 %649
        %v651 = vsel %vm647, %v646, 0.0
        %652 = vadd.xlane.f32.xlu0 %v651
        %v653 = vpop.xlane.xlu0 %652
        %v654 = vlaneseq
        %v655 = vshrl.u32 %v654, 7
        %v656 = vsub.s32 0, %v655
        %v657 = vrot.slane %v634, %v656
        %v658 = vmul.f32 %v638, %v657
        %v659 = vmul.f32 %v639, %v657
        %v660 = vlaneseq
        %v661 = vshrl.u32 %v660, 7
        %v662 = vsub.s32 0, %v661
        %v663 = vrot.slane %v633, %v662
        %v664 = vadd.f32 %v658, %v663
        %v665 = vadd.f32 %v659, %v663
        %v666 = vpack.c.bf16 %v665, %v664
        %v668 = vsel %vm647, %v666, 0
        %v671 = vsel %vm647, %v621, 0
        %673 = vmatprep.subr.bf16.mxu0 0
        %674 = vmatpush1.bf16.xpose.msra.mxu0 %v671
        %675 = vmatprep.subr.bf16.mxu0 0
        %676 = vmatpush1.bf16.xpose.msra.mxu0 0
        %677 = vmatprep.subr.bf16.mxu0 0
        %678 = vmatpush1.bf16.xpose.msra.mxu0 0
        %679 = vmatprep.subr.bf16.mxu0 0
        %680 = vmatpush1.bf16.xpose.msra.mxu0 0
        %681 = vmatprep.subr.bf16.mxu0 0
        %682 = vmatpush1.bf16.xpose.msra.mxu0 0
        %683 = vmatprep.subr.bf16.mxu0 0
        %684 = vmatpush1.bf16.xpose.msra.mxu0 0
        %685 = vmatprep.subr.bf16.mxu0 0
        %686 = vmatpush1.bf16.xpose.msra.mxu0 0
        %687 = vmatprep.subr.bf16.mxu0 0
        %688 = vmatpush1.bf16.xpose.msra.mxu0 0
        %689 = vmatprep.subr.bf16.mxu0 0
        %690 = vmatpush1.bf16.xpose.msra.mxu0 0
        %691 = vmatprep.subr.bf16.mxu0 0
        %692 = vmatpush1.bf16.xpose.msra.mxu0 0
        %693 = vmatprep.subr.bf16.mxu0 0
        %694 = vmatpush1.bf16.xpose.msra.mxu0 0
        %695 = vmatprep.subr.bf16.mxu0 0
        %696 = vmatpush1.bf16.xpose.msra.mxu0 0
        %697 = vmatprep.subr.bf16.mxu0 0
        %698 = vmatpush1.bf16.xpose.msra.mxu0 0
        %699 = vmatprep.subr.bf16.mxu0 0
        %700 = vmatpush1.bf16.xpose.msra.mxu0 0
        %701 = vmatprep.subr.bf16.mxu0 0
        %702 = vmatpush1.bf16.xpose.msra.mxu0 0
        %703 = vmatprep.subr.bf16.mxu0 0
        %704 = vmatpush1.bf16.xpose.msra.mxu0 0
        %705 = vmatprep.mubr.bf16.mxu0 0
        %706 = vmatmul.mubr.bf16.gmra.mrb[0].mxu0 %v668
        %v707 = vpop.f32.mrb[0].mxu0
        %v708 = vadd.f32 0.0, %v707
        %v709 = vpop.f32.mrb[0].mxu0
        %v710 = vpop.f32.mrb[0].mxu0
        %v711 = vadd.f32 0.0, %v710
        %v712 = vpop.f32.mrb[0].mxu0
        %713 = vdwg.mxu0
        %v714 = vadd.f32 %v650, %v708
        %v715 = vadd.f32 %v653, %v711
        %vm716 = vcmp.eq.f32.partialorder %v622, 0.0
        %vm717 = vcmp.eq.f32.partialorder %v623, 0.0
        %v718 = vsel %vm716, 1, 0
        %v719 = vsel %vm717, 1, 0
        %720 = vset.pattern.permute.xlu0 0
        %721 = vperm.xlu0 %720, %v718
        %v722 = vpop.permute.xlu0 %721
        %723 = vset.pattern.permute.xlu0 0
        %724 = vperm.xlu0 %723, %v719
        %v725 = vpop.permute.xlu0 %724
        %vm726 = vcmp.eq.s32.totalorder %v722, 1
        %vm727 = vcmp.eq.s32.totalorder %v725, 1
        %v728 = vsel %vm726, -1e+30, %v714
        %v729 = vsel %vm727, -1e+30, %v715
        %vm730 = vcmp.eq.f32.partialorder %v624, 0.0
        %v731 = vsel %vm730, 1, 0
        %v732 = vlaneseq
        %v733 = vshrl.u32 %v732, 7
        %v734 = vsub.s32 0, %v733
        %v735 = vrot.slane %v731, %v734
        %vm736 = vcmp.eq.s32.totalorder %v735, 1
        %v737 = vsel %vm736, -1e+30, %v728
        %v738 = vsel %vm736, -1e+30, %v729
        %vm739 = vcmask 64512
        %v740 = vsel %vm739, %v737, -inf
        %741 = vmax.xlane.f32.xlu0 %v740
        %v742 = vpop.xlane.xlu0 %741
        %v743 = vsel %vm739, %v738, -inf
        %744 = vmax.xlane.f32.xlu0 %v743
        %v745 = vpop.xlane.xlu0 %744
        %v746 = vsub.f32 %v737, %v742
        %v747 = vsub.f32 %v738, %v745
        %v748 = vmul.f32 %v746, 1.442695
        %v749 = vpow.pop %v748
        %v750 = vmul.f32 %v747, 1.442695
        %v751 = vpow.pop %v750
        %v752 = vsel %vm739, %v749, 0.0
        %753 = vadd.xlane.f32.xlu0 %v752
        %v754 = vpop.xlane.xlu0 %753
        %v755 = vsel %vm739, %v751, 0.0
        %756 = vadd.xlane.f32.xlu0 %v755
        %v757 = vpop.xlane.xlu0 %756
        %v758 = vrcp.pop %v754
        %v759 = vrcp.pop %v757
        %v760 = vmul.f32 %v749, %v758
        %v761 = vmul.f32 %v751, %v759
        %763 = vset.pattern.permute.xlu0 0
        %764 = vperm.xlu0 %763, %v760
        %v765 = vpop.permute.xlu0 %764
        %768 = vset.pattern.permute.xlu0 0
        %769 = vperm.xlu0 %768, %v761
        %v770 = vpop.permute.xlu0 %769
        %v772 = vlaneseq
        %v773 = vshrl.u32 %v772, 7
        %v774 = vsub.s32 0, %v773
        %v775 = vrot.slane %v640, %v774
        %v776 = vmul.f32 %v765, %v775
        %v777 = vmul.f32 %v770, %v775
        %778 = vset.pattern.permute.xlu0 1
        %779 = vperm.xlu0 %778, %v760
        %v780 = vpop.permute.xlu0 %779
        %782 = vset.pattern.permute.xlu0 1
        %783 = vperm.xlu0 %782, %v761
        %v784 = vpop.permute.xlu0 %783
        %v786 = vlaneseq
        %v787 = vshrl.u32 %v786, 7
        %v788 = vsub.s32 1, %v787
        %v789 = vrot.slane %v640, %v788
        %v790 = vmul.f32 %v780, %v789
        %v791 = vmul.f32 %v784, %v789
        %v792 = vadd.f32 %v776, %v790
        %v793 = vadd.f32 %v777, %v791
        %794 = vset.pattern.permute.xlu0 2
        %795 = vperm.xlu0 %794, %v760
        %v796 = vpop.permute.xlu0 %795
        %798 = vset.pattern.permute.xlu0 2
        %799 = vperm.xlu0 %798, %v761
        %v800 = vpop.permute.xlu0 %799
        %v802 = vlaneseq
        %v803 = vshrl.u32 %v802, 7
        %v804 = vsub.s32 2, %v803
        %v805 = vrot.slane %v640, %v804
        %v806 = vmul.f32 %v796, %v805
        %v807 = vmul.f32 %v800, %v805
        %v808 = vadd.f32 %v792, %v806
        %v809 = vadd.f32 %v793, %v807
        %810 = vset.pattern.permute.xlu0 3
        %811 = vperm.xlu0 %810, %v760
        %v812 = vpop.permute.xlu0 %811
        %814 = vset.pattern.permute.xlu0 3
        %815 = vperm.xlu0 %814, %v761
        %v816 = vpop.permute.xlu0 %815
        %v818 = vlaneseq
        %v819 = vshrl.u32 %v818, 7
        %v820 = vsub.s32 3, %v819
        %v821 = vrot.slane %v640, %v820
        %v822 = vmul.f32 %v812, %v821
        %v823 = vmul.f32 %v816, %v821
        %v824 = vadd.f32 %v808, %v822
        %v825 = vadd.f32 %v809, %v823
        %826 = vset.pattern.permute.xlu0 4
        %827 = vperm.xlu0 %826, %v760
        %v828 = vpop.permute.xlu0 %827
        %830 = vset.pattern.permute.xlu0 4
        %831 = vperm.xlu0 %830, %v761
        %v832 = vpop.permute.xlu0 %831
        %v834 = vlaneseq
        %v835 = vshrl.u32 %v834, 7
        %v836 = vsub.s32 4, %v835
        %v837 = vrot.slane %v640, %v836
        %v838 = vmul.f32 %v828, %v837
        %v839 = vmul.f32 %v832, %v837
        %v840 = vadd.f32 %v824, %v838
        %v841 = vadd.f32 %v825, %v839
        %842 = vset.pattern.permute.xlu0 5
        %843 = vperm.xlu0 %842, %v760
        %v844 = vpop.permute.xlu0 %843
        %846 = vset.pattern.permute.xlu0 5
        %847 = vperm.xlu0 %846, %v761
        %v848 = vpop.permute.xlu0 %847
        %v850 = vlaneseq
        %v851 = vshrl.u32 %v850, 7
        %v852 = vsub.s32 5, %v851
        %v853 = vrot.slane %v640, %v852
        %v854 = vmul.f32 %v844, %v853
        %v855 = vmul.f32 %v848, %v853
        %v856 = vadd.f32 %v840, %v854
        %v857 = vadd.f32 %v841, %v855
        %858 = vset.pattern.permute.xlu0 6
        %859 = vperm.xlu0 %858, %v760
        %v860 = vpop.permute.xlu0 %859
        %862 = vset.pattern.permute.xlu0 6
        %863 = vperm.xlu0 %862, %v761
        %v864 = vpop.permute.xlu0 %863
        %v866 = vlaneseq
        %v867 = vshrl.u32 %v866, 7
        %v868 = vsub.s32 6, %v867
        %v869 = vrot.slane %v640, %v868
        %v870 = vmul.f32 %v860, %v869
        %v871 = vmul.f32 %v864, %v869
        %v872 = vadd.f32 %v856, %v870
        %v873 = vadd.f32 %v857, %v871
        %874 = vset.pattern.permute.xlu0 7
        %875 = vperm.xlu0 %874, %v760
        %v876 = vpop.permute.xlu0 %875
        %878 = vset.pattern.permute.xlu0 7
        %879 = vperm.xlu0 %878, %v761
        %v880 = vpop.permute.xlu0 %879
        %v882 = vlaneseq
        %v883 = vshrl.u32 %v882, 7
        %v884 = vsub.s32 7, %v883
        %v885 = vrot.slane %v640, %v884
        %v886 = vmul.f32 %v876, %v885
        %v887 = vmul.f32 %v880, %v885
        %v888 = vadd.f32 %v872, %v886
        %v889 = vadd.f32 %v873, %v887
        %v890 = vmax.f32 %v742, %v745
        %v891 = vrot.slane %v890, 4
        %v892 = vmax.f32 %v890, %v891
        %v893 = vrot.slane %v892, 2
        %v894 = vmax.f32 %v892, %v893
        %v895 = vrot.slane %v894, 1
        %v896 = vmax.f32 %v894, %v895
        %v897 = vsub.f32 %v742, %v896
        %v898 = vsub.f32 %v745, %v896
        %v899 = vmul.f32 %v897, 1.442695
        %v900 = vpow.pop %v899
        %v901 = vmul.f32 %v898, 1.442695
        %v902 = vpow.pop %v901
        %v903 = vadd.f32 %v900, %v902
        %v904 = vrot.slane %v903, 4
        %v905 = vadd.f32 %v903, %v904
        %v906 = vrot.slane %v905, 2
        %v907 = vadd.f32 %v905, %v906
        %v908 = vrot.slane %v907, 1
        %v909 = vadd.f32 %v907, %v908
        %v910 = vrcp.pop %v909
        %v911 = vmul.f32 %v900, %v910
        %v912 = vmul.f32 %v902, %v910
        %v913 = vmul.f32 %v911, %v638
        %v914 = vmul.f32 %v912, %v639
        %v915 = vsel %vm647, %v913, 0.0
        %v916 = vsel %vm647, %v914, 0.0
        %v917 = vadd.f32 %v915, %v916
        %v918 = vrot.slane %v917, 4
        %v919 = vadd.f32 %v917, %v918
        %v920 = vrot.slane %v919, 2
        %v921 = vadd.f32 %v919, %v920
        %v922 = vrot.slane %v921, 1
        %v923 = vadd.f32 %v921, %v922
        %925 = vset.pattern.permute.xlu0 0
        %926 = vperm.xlu0 %925, %v622
        %v927 = vpop.permute.xlu0 %926
        %930 = vset.pattern.permute.xlu0 0
        %931 = vperm.xlu0 %930, %v623
        %v932 = vpop.permute.xlu0 %931
        %v934 = vmul.f32 %v927, %v638
        %v935 = vmul.f32 %v932, %v639
        %v936 = vmul.f32 %v927, %v888
        %v937 = vmul.f32 %v932, %v889
        %v938 = vmul.f32 %v638, %v888
        %v939 = vmul.f32 %v639, %v889
        %v940 = vmul.f32 %v927, %v938
        %v941 = vmul.f32 %v932, %v939
        %v942 = vmul.f32 %v638, %v923
        %v943 = vmul.f32 %v639, %v923
        %v944 = vmul.f32 %v927, %v942
        %v945 = vmul.f32 %v932, %v943
        %948 = vrot.lane.b32.xlu0 %v936, 64
        %v949 = vpop.permute.xlu0 %948
        %950 = vrot.lane.b32.xlu0 %v937, 64
        %v951 = vpop.permute.xlu0 %950
        %956 = vrot.lane.b32.xlu0 %v944, 64
        %v957 = vpop.permute.xlu0 %956
        %958 = vrot.lane.b32.xlu0 %v945, 64
        %v959 = vpop.permute.xlu0 %958
        %v962 = vsel %vm647, %v934, %v949
        %v963 = vsel %vm647, %v935, %v951
        %v964 = vsel %vm647, %v940, %v957
        %v965 = vsel %vm647, %v941, %v959
        %v966 = vpack.c.bf16 %v963, %v962
        %v967 = vpack.c.bf16 %v965, %v964
        %v968 = vld [vmem:[%s9] sm:$0xf]
        %v969 = vld [vmem:[%s9 + $0x4] sm:$0xf]
        %v970 = vld [vmem:[%s9 + $0x8] sm:$0xf]
        %v971 = vld [vmem:[%s9 + $0xc] sm:$0xf]
        %v972 = vld [vmem:[%s9 + $0x10] sm:$0xf]
        %v973 = vld [vmem:[%s9 + $0x14] sm:$0xf]
        %v974 = vld [vmem:[%s9 + $0x18] sm:$0xf]
        %v975 = vld [vmem:[%s9 + $0x1c] sm:$0xf]
        %v976 = vld [vmem:[%s9 + $0x20] sm:$0xf]
        %v977 = vld [vmem:[%s9 + $0x24] sm:$0xf]
        %v978 = vld [vmem:[%s9 + $0x28] sm:$0xf]
        %v979 = vld [vmem:[%s9 + $0x2c] sm:$0xf]
        %v980 = vld [vmem:[%s9 + $0x30] sm:$0xf]
        %v981 = vld [vmem:[%s9 + $0x34] sm:$0xf]
        %v982 = vld [vmem:[%s9 + $0x38] sm:$0xf]
        %v983 = vld [vmem:[%s9 + $0x3c] sm:$0xf]
        %v984 = vld [vmem:[%s9 + $0x40] sm:$0xf]
        %v985 = vld [vmem:[%s9 + $0x44] sm:$0xf]
        %v986 = vld [vmem:[%s9 + $0x48] sm:$0xf]
        %v987 = vld [vmem:[%s9 + $0x4c] sm:$0xf]
        %v988 = vld [vmem:[%s9 + $0x50] sm:$0xf]
        %v989 = vld [vmem:[%s9 + $0x54] sm:$0xf]
        %v990 = vld [vmem:[%s9 + $0x58] sm:$0xf]
        %v991 = vld [vmem:[%s9 + $0x5c] sm:$0xf]
        %v992 = vld [vmem:[%s9 + $0x60] sm:$0xf]
        %v993 = vld [vmem:[%s9 + $0x64] sm:$0xf]
        %v994 = vld [vmem:[%s9 + $0x68] sm:$0xf]
        %v995 = vld [vmem:[%s9 + $0x6c] sm:$0xf]
        %v996 = vld [vmem:[%s9 + $0x70] sm:$0xf]
        %v997 = vld [vmem:[%s9 + $0x74] sm:$0xf]
        %v998 = vld [vmem:[%s9 + $0x78] sm:$0xf]
        %v999 = vld [vmem:[%s9 + $0x7c] sm:$0xf]
        %v1032 = vunpack.c.l.b16 %v968
        %v1033 = vunpack.c.l.b16 %v969
        %v1034 = vunpack.c.l.b16 %v970
        %v1035 = vunpack.c.l.b16 %v971
        %v1036 = vunpack.c.l.b16 %v972
        %v1037 = vunpack.c.l.b16 %v973
        %v1038 = vunpack.c.l.b16 %v974
        %v1039 = vunpack.c.l.b16 %v975
        %v1040 = vunpack.c.l.b16 %v976
        %v1041 = vunpack.c.l.b16 %v977
        %v1042 = vunpack.c.l.b16 %v978
        %v1043 = vunpack.c.l.b16 %v979
        %v1044 = vunpack.c.l.b16 %v980
        %v1045 = vunpack.c.l.b16 %v981
        %v1046 = vunpack.c.l.b16 %v982
        %v1047 = vunpack.c.l.b16 %v983
        %v1048 = vunpack.c.l.b16 %v984
        %v1049 = vunpack.c.l.b16 %v985
        %v1050 = vunpack.c.l.b16 %v986
        %v1051 = vunpack.c.l.b16 %v987
        %v1052 = vunpack.c.l.b16 %v988
        %v1053 = vunpack.c.l.b16 %v989
        %v1054 = vunpack.c.l.b16 %v990
        %v1055 = vunpack.c.l.b16 %v991
        %v1056 = vunpack.c.l.b16 %v992
        %v1057 = vunpack.c.l.b16 %v993
        %v1058 = vunpack.c.l.b16 %v994
        %v1059 = vunpack.c.l.b16 %v995
        %v1060 = vunpack.c.l.b16 %v996
        %v1061 = vunpack.c.l.b16 %v997
        %v1062 = vunpack.c.l.b16 %v998
        %v1063 = vunpack.c.l.b16 %v999
        %v1064 = vpack.c.b16 %v1033, %v1032
        %v1065 = vpack.c.b16 %v1035, %v1034
        %v1066 = vpack.c.b16 %v1037, %v1036
        %v1067 = vpack.c.b16 %v1039, %v1038
        %v1068 = vpack.c.b16 %v1041, %v1040
        %v1069 = vpack.c.b16 %v1043, %v1042
        %v1070 = vpack.c.b16 %v1045, %v1044
        %v1071 = vpack.c.b16 %v1047, %v1046
        %v1072 = vpack.c.b16 %v1049, %v1048
        %v1073 = vpack.c.b16 %v1051, %v1050
        %v1074 = vpack.c.b16 %v1053, %v1052
        %v1075 = vpack.c.b16 %v1055, %v1054
        %v1076 = vpack.c.b16 %v1057, %v1056
        %v1077 = vpack.c.b16 %v1059, %v1058
        %v1078 = vpack.c.b16 %v1061, %v1060
        %v1079 = vpack.c.b16 %v1063, %v1062
        %1096 = vmatprep.subr.bf16.mxu0 0
        %1097 = vmatpush1.bf16.msra.mxu0 %v1064
        %1098 = vmatprep.subr.bf16.mxu0 0
        %1099 = vmatpush1.bf16.msra.mxu0 %v1065
        %1100 = vmatprep.subr.bf16.mxu0 0
        %1101 = vmatpush1.bf16.msra.mxu0 %v1066
        %1102 = vmatprep.subr.bf16.mxu0 0
        %1103 = vmatpush1.bf16.msra.mxu0 %v1067
        %1104 = vmatprep.subr.bf16.mxu0 0
        %1105 = vmatpush1.bf16.msra.mxu0 %v1068
        %1106 = vmatprep.subr.bf16.mxu0 0
        %1107 = vmatpush1.bf16.msra.mxu0 %v1069
        %1108 = vmatprep.subr.bf16.mxu0 0
        %1109 = vmatpush1.bf16.msra.mxu0 %v1070
        %1110 = vmatprep.subr.bf16.mxu0 0
        %1111 = vmatpush1.bf16.msra.mxu0 %v1071
        %1112 = vmatprep.subr.bf16.mxu0 0
        %1113 = vmatpush1.bf16.msra.mxu0 %v1072
        %1114 = vmatprep.subr.bf16.mxu0 0
        %1115 = vmatpush1.bf16.msra.mxu0 %v1073
        %1116 = vmatprep.subr.bf16.mxu0 0
        %1117 = vmatpush1.bf16.msra.mxu0 %v1074
        %1118 = vmatprep.subr.bf16.mxu0 0
        %1119 = vmatpush1.bf16.msra.mxu0 %v1075
        %1120 = vmatprep.subr.bf16.mxu0 0
        %1121 = vmatpush1.bf16.msra.mxu0 %v1076
        %1122 = vmatprep.subr.bf16.mxu0 0
        %1123 = vmatpush1.bf16.msra.mxu0 %v1077
        %1124 = vmatprep.subr.bf16.mxu0 0
        %1125 = vmatpush1.bf16.msra.mxu0 %v1078
        %1126 = vmatprep.subr.bf16.mxu0 0
        %1127 = vmatpush1.bf16.msra.mxu0 %v1079
        %1128 = vmatprep.mubr.bf16.mxu0 %v967
        %1129 = vmatmul.mubr.bf16.gmra.mrb[0].mxu0 %v966
        %v1130 = vpop.f32.mrb[0].mxu0
        %v1131 = vadd.f32 0.0, %v1130
        %v1132 = vpop.f32.mrb[0].mxu0
        %v1133 = vpop.f32.mrb[0].mxu0
        %v1134 = vadd.f32 0.0, %v1133
        %v1135 = vpop.f32.mrb[0].mxu0
        %1136 = vdwg.mxu0
        %v1137 = vtanh.pop %v1131
        %v1138 = vtanh.pop %v1134
        %v1139 = vpack.c.bf16 %v1138, %v1137
        %v1140 = vld [vmem:[#allocation10] sm:$0xf]
        %v1141 = vld [vmem:[#allocation10 + $0x4] sm:$0xf]
        %v1142 = vld [vmem:[#allocation10 + $0x8] sm:$0xf]
        %v1143 = vld [vmem:[#allocation10 + $0xc] sm:$0xf]
        %v1144 = vld [vmem:[#allocation10 + $0x10] sm:$0xf]
        %v1145 = vld [vmem:[#allocation10 + $0x14] sm:$0xf]
        %v1146 = vld [vmem:[#allocation10 + $0x18] sm:$0xf]
        %v1147 = vld [vmem:[#allocation10 + $0x1c] sm:$0xf]
        %v1156 = vunpack.c.l.b16 %v1140
        %v1157 = vunpack.c.l.b16 %v1141
        %v1158 = vunpack.c.l.b16 %v1142
        %v1159 = vunpack.c.l.b16 %v1143
        %v1160 = vunpack.c.l.b16 %v1144
        %v1161 = vunpack.c.l.b16 %v1145
        %v1162 = vunpack.c.l.b16 %v1146
        %v1163 = vunpack.c.l.b16 %v1147
        %v1164 = vpack.c.b16 %v1157, %v1156
        %v1165 = vpack.c.b16 %v1159, %v1158
        %v1166 = vpack.c.b16 %v1161, %v1160
        %v1167 = vpack.c.b16 %v1163, %v1162
        %v1173 = vsel %vm647, %v1139, 0
        %1175 = vmatprep.subr.bf16.mxu0 0
        %1176 = vmatpush1.bf16.msra.mxu0 %v1164
        %1177 = vmatprep.subr.bf16.mxu0 0
        %1178 = vmatpush1.bf16.msra.mxu0 %v1165
        %1179 = vmatprep.subr.bf16.mxu0 0
        %1180 = vmatpush1.bf16.msra.mxu0 %v1166
        %1181 = vmatprep.subr.bf16.mxu0 0
        %1182 = vmatpush1.bf16.msra.mxu0 %v1167
        %1183 = vmatprep.subr.bf16.mxu0 0
        %1184 = vmatpush1.bf16.msra.mxu0 0
        %1185 = vmatprep.subr.bf16.mxu0 0
        %1186 = vmatpush1.bf16.msra.mxu0 0
        %1187 = vmatprep.subr.bf16.mxu0 0
        %1188 = vmatpush1.bf16.msra.mxu0 0
        %1189 = vmatprep.subr.bf16.mxu0 0
        %1190 = vmatpush1.bf16.msra.mxu0 0
        %1191 = vmatprep.subr.bf16.mxu0 0
        %1192 = vmatpush1.bf16.msra.mxu0 0
        %1193 = vmatprep.subr.bf16.mxu0 0
        %1194 = vmatpush1.bf16.msra.mxu0 0
        %1195 = vmatprep.subr.bf16.mxu0 0
        %1196 = vmatpush1.bf16.msra.mxu0 0
        %1197 = vmatprep.subr.bf16.mxu0 0
        %1198 = vmatpush1.bf16.msra.mxu0 0
        %1199 = vmatprep.subr.bf16.mxu0 0
        %1200 = vmatpush1.bf16.msra.mxu0 0
        %1201 = vmatprep.subr.bf16.mxu0 0
        %1202 = vmatpush1.bf16.msra.mxu0 0
        %1203 = vmatprep.subr.bf16.mxu0 0
        %1204 = vmatpush1.bf16.msra.mxu0 0
        %1205 = vmatprep.subr.bf16.mxu0 0
        %1206 = vmatpush1.bf16.msra.mxu0 0
        %1207 = vmatprep.mubr.bf16.mxu0 0
        %1208 = vmatmul.mubr.bf16.gmra.mrb[0].mxu0 %v1173
        %v1209 = vpop.f32.mrb[0].mxu0
        %v1210 = vadd.f32 0.0, %v1209
        %v1211 = vpop.f32.mrb[0].mxu0
        %v1212 = vpop.f32.mrb[0].mxu0
        %v1213 = vadd.f32 0.0, %v1212
        %v1214 = vpop.f32.mrb[0].mxu0
        %1215 = vdwg.mxu0
        %1218 = vrot.lane.b32.xlu0 %v1210, 64
        %v1219 = vpop.permute.xlu0 %1218
        %1220 = vrot.lane.b32.xlu0 %v1213, 64
        %v1221 = vpop.permute.xlu0 %1220
        %v1224 = vadd.f32 %v1131, %v1219
        %v1225 = vadd.f32 %v1134, %v1221
        %v1226 = vpack.c.bf16 %v640, %v640
        %v1227 = vld [vmem:[#allocation11] sm:$0xf]
        %v1228 = vld [vmem:[#allocation11 + $0x4] sm:$0xf]
        %v1229 = vld [vmem:[#allocation11 + $0x8] sm:$0xf]
        %v1230 = vld [vmem:[#allocation11 + $0xc] sm:$0xf]
        %v1231 = vld [vmem:[#allocation11 + $0x10] sm:$0xf]
        %v1232 = vld [vmem:[#allocation11 + $0x14] sm:$0xf]
        %v1233 = vld [vmem:[#allocation11 + $0x18] sm:$0xf]
        %v1234 = vld [vmem:[#allocation11 + $0x1c] sm:$0xf]
        %v1243 = vunpack.c.l.b16 %v1227
        %v1244 = vunpack.c.l.b16 %v1228
        %v1245 = vunpack.c.l.b16 %v1229
        %v1246 = vunpack.c.l.b16 %v1230
        %v1247 = vunpack.c.l.b16 %v1231
        %v1248 = vunpack.c.l.b16 %v1232
        %v1249 = vunpack.c.l.b16 %v1233
        %v1250 = vunpack.c.l.b16 %v1234
        %v1251 = vpack.c.b16 %v1244, %v1243
        %v1252 = vpack.c.b16 %v1246, %v1245
        %v1253 = vpack.c.b16 %v1248, %v1247
        %v1254 = vpack.c.b16 %v1250, %v1249
        %v1260 = vsel %vm647, %v1226, 0
        %1262 = vmatprep.subr.bf16.mxu0 0
        %1263 = vmatpush1.bf16.msra.mxu0 %v1251
        %1264 = vmatprep.subr.bf16.mxu0 0
        %1265 = vmatpush1.bf16.msra.mxu0 %v1252
        %1266 = vmatprep.subr.bf16.mxu0 0
        %1267 = vmatpush1.bf16.msra.mxu0 %v1253
        %1268 = vmatprep.subr.bf16.mxu0 0
        %1269 = vmatpush1.bf16.msra.mxu0 %v1254
        %1270 = vmatprep.subr.bf16.mxu0 0
        %1271 = vmatpush1.bf16.msra.mxu0 0
        %1272 = vmatprep.subr.bf16.mxu0 0
        %1273 = vmatpush1.bf16.msra.mxu0 0
        %1274 = vmatprep.subr.bf16.mxu0 0
        %1275 = vmatpush1.bf16.msra.mxu0 0
        %1276 = vmatprep.subr.bf16.mxu0 0
        %1277 = vmatpush1.bf16.msra.mxu0 0
        %1278 = vmatprep.subr.bf16.mxu0 0
        %1279 = vmatpush1.bf16.msra.mxu0 0
        %1280 = vmatprep.subr.bf16.mxu0 0
        %1281 = vmatpush1.bf16.msra.mxu0 0
        %1282 = vmatprep.subr.bf16.mxu0 0
        %1283 = vmatpush1.bf16.msra.mxu0 0
        %1284 = vmatprep.subr.bf16.mxu0 0
        %1285 = vmatpush1.bf16.msra.mxu0 0
        %1286 = vmatprep.subr.bf16.mxu0 0
        %1287 = vmatpush1.bf16.msra.mxu0 0
        %1288 = vmatprep.subr.bf16.mxu0 0
        %1289 = vmatpush1.bf16.msra.mxu0 0
        %1290 = vmatprep.subr.bf16.mxu0 0
        %1291 = vmatpush1.bf16.msra.mxu0 0
        %1292 = vmatprep.subr.bf16.mxu0 0
        %1293 = vmatpush1.bf16.msra.mxu0 0
        %1294 = vmatprep.mubr.bf16.mxu0 0
        %1295 = vmatmul.mubr.bf16.gmra.mrb[0].mxu0 %v1260
        %v1296 = vpop.f32.mrb[0].mxu0
        %v1297 = vadd.f32 0.0, %v1296
        %v1298 = vpop.f32.mrb[0].mxu0
        %v1299 = vpop.f32.mrb[0].mxu0
        %v1300 = vpop.f32.mrb[0].mxu0
        %1301 = vdwg.mxu0
        %v1302 = vtanh.pop %v1297
        %v1303 = vlaneseq
        %v1304 = vshrl.u32 %v1303, 7
        %v1305 = vsub.s32 0, %v1304
        %v1306 = vrot.slane %v636, %v1305
        %v1307 = vmul.f32 %v1302, %v1306
        %vm1308 = vcmask 261120
        %v1309 = vsel %vm1308, %v1307, 0.0
        %1310 = vadd.xlane.f32.xlu0 %v1309
        %v1311 = vpop.xlane.xlu0 %1310
        %vm1312 = vcmp.eq.f32.partialorder %v625, 0.0
        %v1313 = vsel %vm1312, -1e+30, %v1311
        %vm1314 = vcmask 7168
        %v1315 = vsel %vm1314, %v1313, -inf
        %v1316 = vrot.slane %v1315, 4
        %v1317 = vmax.f32 %v1315, %v1316
        %v1318 = vrot.slane %v1317, 2
        %v1319 = vmax.f32 %v1317, %v1318
        %v1320 = vrot.slane %v1319, 1
        %v1321 = vmax.f32 %v1319, %v1320
        %v1322 = vsub.f32 %v1313, %v1321
        %v1323 = vmul.f32 %v1322, 1.442695
        %v1324 = vpow.pop %v1323
        %v1325 = vsel %vm1314, %v1324, 0.0
        %v1326 = vrot.slane %v1325, 4
        %v1327 = vadd.f32 %v1325, %v1326
        %v1328 = vrot.slane %v1327, 2
        %v1329 = vadd.f32 %v1327, %v1328
        %v1330 = vrot.slane %v1329, 1
        %v1331 = vadd.f32 %v1329, %v1330
        %v1332 = vrcp.pop %v1331
        %v1333 = vmul.f32 %v1324, %v1332
        %1335 = vset.pattern.permute.xlu0 0
        %1336 = vperm.xlu0 %1335, %v1333
        %v1337 = vpop.permute.xlu0 %1336
        %v1339 = vmul.f32 %v1337, %v1297
        %vm1340 = vcmask 523520
        %v1341 = vsel %vm1340, %v1339, 0.0
        %v1342 = vrot.slane %v1341, 4
        %v1343 = vadd.f32 %v1341, %v1342
        %v1344 = vrot.slane %v1343, 2
        %v1345 = vadd.f32 %v1343, %v1344
        %v1346 = vrot.slane %v1345, 1
        %v1347 = vadd.f32 %v1345, %v1346
        %1349 = vrot.lane.b32.xlu0 %v1347, 32
        %v1350 = vpop.permute.xlu0 %1349
        %v1352 = vadd.f32 %v1224, %v1350
        %v1353 = vadd.f32 %v1225, %v1350
        %v1354 = vtanh.pop %v1352
        %v1355 = vtanh.pop %v1353
        %v1356 = vlaneseq
        %v1357 = vshrl.u32 %v1356, 7
        %v1358 = vsub.s32 0, %v1357
        %v1359 = vrot.slane %v637, %v1358
        %1361 = vrot.lane.b32.xlu0 %v1359, 64
        %v1362 = vpop.permute.xlu0 %1361
        %v1364 = vmul.f32 %v1354, %v1362
        %v1365 = vmul.f32 %v1355, %v1362
        %1368 = vrot.lane.b32.xlu0 %v1364, 64
        %v1369 = vpop.permute.xlu0 %1368
        %1370 = vrot.lane.b32.xlu0 %v1365, 64
        %v1371 = vpop.permute.xlu0 %1370
        %v1374 = vsel %vm1308, %v1369, 0.0
        %1375 = vadd.xlane.f32.xlu0 %v1374
        %v1376 = vpop.xlane.xlu0 %1375
        %v1377 = vsel %vm1308, %v1371, 0.0
        %1378 = vadd.xlane.f32.xlu0 %v1377
        %v1379 = vpop.xlane.xlu0 %1378
        %v1380 = vsel %vm716, -1e+30, %v1376
        %v1381 = vsel %vm717, -1e+30, %v1379
        %v1382 = vsel %vm1314, %v1380, -inf
        %v1383 = vsel %vm1314, %v1381, -inf
        %v1384 = vmax.f32 %v1382, %v1383
        %v1385 = vrot.slane %v1384, 4
        %v1386 = vmax.f32 %v1384, %v1385
        %v1387 = vrot.slane %v1386, 2
        %v1388 = vmax.f32 %v1386, %v1387
        %v1389 = vrot.slane %v1388, 1
        %v1390 = vmax.f32 %v1388, %v1389
        %v1391 = vsub.f32 %v1380, %v1390
        %v1392 = vsub.f32 %v1381, %v1390
        %v1393 = vmul.f32 %v1391, 1.442695
        %v1394 = vpow.pop %v1393
        %v1395 = vmul.f32 %v1392, 1.442695
        %v1396 = vpow.pop %v1395
        %v1397 = vsel %vm1314, %v1394, 0.0
        %v1398 = vsel %vm1314, %v1396, 0.0
        %v1399 = vadd.f32 %v1397, %v1398
        %v1400 = vrot.slane %v1399, 4
        %v1401 = vadd.f32 %v1399, %v1400
        %v1402 = vrot.slane %v1401, 2
        %v1403 = vadd.f32 %v1401, %v1402
        %v1404 = vrot.slane %v1403, 1
        %v1405 = vadd.f32 %v1403, %v1404
        %v1406 = vrcp.pop %v1405
        %v1407 = vmul.f32 %v1394, %v1406
        %v1408 = vmul.f32 %v1396, %v1406
        %1410 = vset.pattern.permute.xlu0 0
        %1411 = vperm.xlu0 %1410, %v1407
        %v1412 = vpop.permute.xlu0 %1411
        %1415 = vset.pattern.permute.xlu0 0
        %1416 = vperm.xlu0 %1415, %v1408
        %v1417 = vpop.permute.xlu0 %1416
        %v1419 = vmul.f32 %v1412, %v1224
        %v1420 = vmul.f32 %v1417, %v1225
        %vm1421 = vcmask 1048320
        %v1422 = vsel %vm1421, %v1419, 0.0
        %v1423 = vsel %vm1421, %v1420, 0.0
        %v1424 = vadd.f32 %v1422, %v1423
        %v1425 = vrot.slane %v1424, 4
        %v1426 = vadd.f32 %v1424, %v1425
        %v1427 = vrot.slane %v1426, 2
        %v1428 = vadd.f32 %v1426, %v1427
        %v1429 = vrot.slane %v1428, 1
        %v1430 = vadd.f32 %v1428, %v1429
        %vm1431 = vcmp.ge.f32.partialorder %v1430, 0.0
        %v1432 = vmul.f32 %v1430, 0.01
        %v1433 = vsel %vm1431, %v1430, %v1432
        %v1434 = vunpack.c.l.bf16 %v626
        %v1435 = vunpack.c.l.bf16 %v627
        %v1436 = vunpack.c.l.bf16 %v628
        %v1437 = vlaneseq
        %v1438 = vshrl.u32 %v1437, 7
        %v1439 = vsub.s32 0, %v1438
        %v1440 = vrot.slane %v635, %v1439
        %v1441 = vmul.f32 %v1434, %v1440
        %v1442 = vmul.f32 %v1435, %v1440
        %v1443 = vmul.f32 %v1436, %v1440
        %v1444 = vsel %vm1308, %v1441, 0.0
        %1445 = vadd.xlane.f32.xlu0 %v1444
        %v1446 = vpop.xlane.xlu0 %1445
        %v1447 = vsel %vm1308, %v1442, 0.0
        %1448 = vadd.xlane.f32.xlu0 %v1447
        %v1449 = vpop.xlane.xlu0 %1448
        %v1450 = vsel %vm1308, %v1443, 0.0
        %1451 = vadd.xlane.f32.xlu0 %v1450
        %v1452 = vpop.xlane.xlu0 %1451
        %vm1453 = vcmp.eq.f32.partialorder %v629, 0.0
        %vm1454 = vcmp.eq.f32.partialorder %v630, 0.0
        %vm1455 = vcmp.eq.f32.partialorder %v631, 0.0
        %v1456 = vsel %vm1453, -1e+30, %v1446
        %v1457 = vsel %vm1454, -1e+30, %v1449
        %v1458 = vsel %vm1455, -1e+30, %v1452
        %v1459 = vsel %vm1314, %v1456, -inf
        %v1460 = vrot.slane %v1459, 4
        %v1461 = vmax.f32 %v1459, %v1460
        %v1462 = vrot.slane %v1461, 2
        %v1463 = vmax.f32 %v1461, %v1462
        %v1464 = vrot.slane %v1463, 1
        %v1465 = vmax.f32 %v1463, %v1464
        %v1466 = vsel %vm1314, %v1457, -inf
        %v1467 = vrot.slane %v1466, 4
        %v1468 = vmax.f32 %v1466, %v1467
        %v1469 = vrot.slane %v1468, 2
        %v1470 = vmax.f32 %v1468, %v1469
        %v1471 = vrot.slane %v1470, 1
        %v1472 = vmax.f32 %v1470, %v1471
        %v1473 = vsel %vm1314, %v1458, -inf
        %v1474 = vrot.slane %v1473, 4
        %v1475 = vmax.f32 %v1473, %v1474
        %v1476 = vrot.slane %v1475, 2
        %v1477 = vmax.f32 %v1475, %v1476
        %v1478 = vrot.slane %v1477, 1
        %v1479 = vmax.f32 %v1477, %v1478
        %v1480 = vsub.f32 %v1456, %v1465
        %v1481 = vsub.f32 %v1457, %v1472
        %v1482 = vsub.f32 %v1458, %v1479
        %v1483 = vmul.f32 %v1480, 1.442695
        %v1484 = vpow.pop %v1483
        %v1485 = vmul.f32 %v1481, 1.442695
        %v1486 = vpow.pop %v1485
        %v1487 = vmul.f32 %v1482, 1.442695
        %v1488 = vpow.pop %v1487
        %v1489 = vsel %vm1314, %v1484, 0.0
        %v1490 = vrot.slane %v1489, 4
        %v1491 = vadd.f32 %v1489, %v1490
        %v1492 = vrot.slane %v1491, 2
        %v1493 = vadd.f32 %v1491, %v1492
        %v1494 = vrot.slane %v1493, 1
        %v1495 = vadd.f32 %v1493, %v1494
        %v1496 = vsel %vm1314, %v1486, 0.0
        %v1497 = vrot.slane %v1496, 4
        %v1498 = vadd.f32 %v1496, %v1497
        %v1499 = vrot.slane %v1498, 2
        %v1500 = vadd.f32 %v1498, %v1499
        %v1501 = vrot.slane %v1500, 1
        %v1502 = vadd.f32 %v1500, %v1501
        %v1503 = vsel %vm1314, %v1488, 0.0
        %v1504 = vrot.slane %v1503, 4
        %v1505 = vadd.f32 %v1503, %v1504
        %v1506 = vrot.slane %v1505, 2
        %v1507 = vadd.f32 %v1505, %v1506
        %v1508 = vrot.slane %v1507, 1
        %v1509 = vadd.f32 %v1507, %v1508
        %v1510 = vrcp.pop %v1495
        %v1511 = vrcp.pop %v1502
        %v1512 = vrcp.pop %v1509
        %v1513 = vmul.f32 %v1484, %v1510
        %v1514 = vmul.f32 %v1486, %v1511
        %v1515 = vmul.f32 %v1488, %v1512
        %1517 = vset.pattern.permute.xlu0 0
        %1518 = vperm.xlu0 %1517, %v1513
        %v1519 = vpop.permute.xlu0 %1518
        %1522 = vset.pattern.permute.xlu0 0
        %1523 = vperm.xlu0 %1522, %v1514
        %v1524 = vpop.permute.xlu0 %1523
        %1527 = vset.pattern.permute.xlu0 0
        %1528 = vperm.xlu0 %1527, %v1515
        %v1529 = vpop.permute.xlu0 %1528
        %v1531 = vmul.f32 %v1519, %v1434
        %v1532 = vmul.f32 %v1524, %v1435
        %v1533 = vmul.f32 %v1529, %v1436
        %v1534 = vsel %vm1308, %v1531, 0.0
        %v1535 = vrot.slane %v1534, 4
        %v1536 = vadd.f32 %v1534, %v1535
        %v1537 = vrot.slane %v1536, 2
        %v1538 = vadd.f32 %v1536, %v1537
        %v1539 = vrot.slane %v1538, 1
        %v1540 = vadd.f32 %v1538, %v1539
        %v1541 = vsel %vm1308, %v1532, 0.0
        %v1542 = vrot.slane %v1541, 4
        %v1543 = vadd.f32 %v1541, %v1542
        %v1544 = vrot.slane %v1543, 2
        %v1545 = vadd.f32 %v1543, %v1544
        %v1546 = vrot.slane %v1545, 1
        %v1547 = vadd.f32 %v1545, %v1546
        %v1548 = vsel %vm1308, %v1533, 0.0
        %v1549 = vrot.slane %v1548, 4
        %v1550 = vadd.f32 %v1548, %v1549
        %v1551 = vrot.slane %v1550, 2
        %v1552 = vadd.f32 %v1550, %v1551
        %v1553 = vrot.slane %v1552, 1
        %v1554 = vadd.f32 %v1552, %v1553
        %1556 = vrot.lane.b32.xlu0 %v1433, 32
        %v1557 = vpop.permute.xlu0 %1556
        %v1559 = vmul.f32 %v1540, %v1557
        %v1560 = vmul.f32 %v1547, %v1557
        %v1561 = vmul.f32 %v1554, %v1557
        %v1565 = vrot.slane %v1560, 7
        %vm1566 = vcmask 1041409
        %v1567 = vsel %vm1566, %v1565, %v1559
        %v1568 = vrot.slane %v1561, 6
        %vm1569 = vcmask 1042434
        %v1570 = vsel %vm1569, %v1568, %v1567
        %vm1572 = vcmask 256000
        %v1573 = vsel %vm1572, %v1570, 0.0
        %1574 = vadd.xlane.f32.xlu0 %v1573
        %v1575 = vpop.xlane.xlu0 %1574
        %v1576 = vlaneseq
        %v1577 = vand.u32 %v1576, 127
        %vm1578 = vcmp.eq.s32.totalorder %v1577, 0
        %v1579 = vsel %vm1578, %v1575, -1e+30
        %vm1580 = vcmp.eq.s32.totalorder %v1577, 1
        %v1582 = vrot.slane %v1579, 7
        %v1584 = vsel %vm1580, %v1575, %v1582
        %vm1585 = vcmp.eq.s32.totalorder %v1577, 2
        %v1587 = vrot.slane %v1584, 7
        %v1589 = vsel %vm1585, %v1575, %v1587
        %v1590 = vsel %vm1569, %v1589, -inf
        %1591 = vmax.xlane.f32.xlu0 %v1590
        %v1592 = vpop.xlane.xlu0 %1591
        %v1593 = vsub.f32 %v1589, %v1592
        %v1594 = vmul.f32 %v1593, 1.442695
        %v1595 = vpow.pop %v1594
        %v1596 = vsel %vm1569, %v1595, 0.0
        %1597 = vadd.xlane.f32.xlu0 %v1596
        %v1598 = vpop.xlane.xlu0 %1597
        %v1599 = vrcp.pop %v1598
        %v1600 = vmul.f32 %v1595, %v1599
        %1601 = vst [vmem:[%s599 - $0x2] sm:$0x4] %v1600
        %s1602 = sand.u32 %s329, 1
        %s1603 = scalar_lea.sflag [#allocation4], %s1602
        %s1604 = sand.u32 %s329, 1
        %s1605 = scalar_lea.vmem [#allocation13], %s1604
        // Predicated region
        $region93: #{tpu_custom_call.1} parent=67 // pred_check
          %p1606 = pneg %p339
        $region94: #{tpu_custom_call.1} parent=67 // pred_check_branch
          %1608 = sbr.rel (%p1606) target = $region96
        $region95: #{tpu_custom_call.1} parent=67 // pred_region
          %s1610 = ssub.s32 16, 16
          %1611 = vsyncadd %s1603, %s1610
          %s1612 = smul.addr %s34, 16
          %s1613 = scalar_lea.hbm %s12, %s1612
          %s1615 = sshll.u32 %s1605, 4
          %s1616 = int_to_ptr.vmem [resolvable:$true] %s1615
          %1618 = dma.vmem_to_hbm [thread:$0]  %s1616, 16, %s1613, %s1603
        $region96: #{tpu_custom_call.1} parent=67 // pred_fallthru
          _
      $region68: #{tpu_custom_call.1} parent=5 // pred_fallthru
        _
      %p1619 = scmp.le.s32.totalorder 2, %s29
      // Predicated region
      $region97: #{tpu_custom_call.1} parent=5 // pred_check
        %p1620 = pneg %p1619
      $region98: #{tpu_custom_call.1} parent=5 // pred_check_branch
        %1622 = sbr.rel (%p1620) target = $region100
      $region99: #{tpu_custom_call.1} parent=5 // pred_region
        %s1623 = ssub.s32 %s29, 2
        // Predicated region
        $region101: #{tpu_custom_call.1} parent=99 // pred_check
          %p1624 = pneg %p345
        $region102: #{tpu_custom_call.1} parent=99 // pred_check_branch
          %1626 = sbr.rel (%p1624) target = $region104
        $region103: #{tpu_custom_call.1} parent=99 // pred_region
          %s1627 = sand.u32 %s330, 1
          %s1628 = scalar_lea.sflag [#allocation4], %s1627
          %s1629 = sand.u32 %s330, 1
          %s1630 = scalar_lea.vmem [#allocation13], %s1629
          %1631 = dma.done %s1628, 16
        $region104: #{tpu_custom_call.1} parent=99 // pred_fallthru
          _
      $region100: #{tpu_custom_call.1} parent=5 // pred_fallthru
        _
    $region6: #{tpu_custom_call.1} parent=1 // loop_footer
      %s33 = sadd.s32 1, %s29
    $region7: #{tpu_custom_call.1} parent=1 // loop_footer_branch
      %28 = sbr.rel target = $region3
    $region8: #{tpu_custom_call.1} parent=1 // loop_exit
      _
    %1632 = vsyncpa [#allocation3], 1
    %s1633 = scalar_lea.sflag [#allocation3], 1
    %1634 = vsyncpa %s1633, 1
    %1635 = vsyncpa [#allocation6], 1
    %s1636 = scalar_lea.sflag [#allocation6], 1
    %1637 = vsyncpa %s1636, 1
    %1638 = vsyncpa [#allocation9], 1
    %1639 = vsyncpa [#allocation12], 1
    %1640 = vsyncpa [#allocation4], 1
    %s1641 = scalar_lea.sflag [#allocation4], 1
    %1642 = vsyncpa %s1641, 1

</llo_original>
